<compile_context>
chip_gen: v6e
topology: v6e:2x2x1
jax: 0.10.0
libtpu: 0.0.40
codegen_flags: <defaults>
</compile_context>

<pallas_src>
import functools
import numpy as np
import jax
import jax.numpy as jnp
from jax.experimental import pallas as pl
from jax.experimental.pallas import tpu as pltpu

IMG_DIM = 784
LAYER_DIMS = [(IMG_DIM, 128), (128, 64), (64, 16), (16, 8), (8, 1)]


def _leaky_relu(h, slope=0.1):
    return jnp.where(h >= 0, h, slope * h)


def disc_kernel(x_ref,
                w1_ref, b1_ref,     # (784, 128) [in,out],  (1, 128)
                w2_ref, b2_ref,     # (64, 128)  [out,in],  (64, 1)
                w3_ref, b3_ref,     # (16, 64)   [out,in],  (16, 1)
                w4_ref, b4_ref,     # (8, 16)    [out,in],  (8, 1)
                w5_ref, b5_ref,     # (8, 1)     [in,out],  (1, 1)
                o_ref):             # (1, BM)
    # ---- layer 1, batch-major: (BM, 784) @ (784, 128) on the MXU, f32 accum ----
    h = jnp.dot(x_ref[...], w1_ref[...], preferred_element_type=jnp.float32)
    h = _leaky_relu(h + b1_ref[...])                      # (BM, 128) f32

    # ---- switch to feature-major with ONE tile-aligned XLU transpose ----------
    t = h.T                                               # (128, BM) f32

    # ---- layers 2-4: W_pt(out,in) @ t(in,BM) -> lane-dense (out, BM) ----------
    t = _leaky_relu(jnp.dot(w2_ref[...], t.astype(w2_ref.dtype),
                            preferred_element_type=jnp.float32) + b2_ref[...])  # (64, BM)
    t = _leaky_relu(jnp.dot(w3_ref[...], t.astype(w3_ref.dtype),
                            preferred_element_type=jnp.float32) + b3_ref[...])  # (16, BM)
    t = _leaky_relu(jnp.dot(w4_ref[...], t.astype(w4_ref.dtype),
                            preferred_element_type=jnp.float32) + b4_ref[...])  # (8, BM)

    # ---- layer 5 (8 -> 1) on the VPU: broadcast-mul + sublane reduce ----------
    logits_t = jnp.sum(t * w5_ref[...], axis=0, keepdims=True) + b5_ref[...]    # (1, BM)

    # ---- sigmoid: exp on EUP, approximate reciprocal on EUP -------------------
    o_ref[...] = pl.reciprocal(1.0 + jnp.exp(-logits_t), approx=True)


@functools.partial(jax.jit, static_argnames=("block_rows", "use_bf16"))
def discriminator_forward(x, params, *, block_rows=512, use_bf16=False):
    """x: (B, IMG_DIM); params: PyTorch-layout list of (W (out,in), b (out,))."""
    B, K = x.shape
    assert K == IMG_DIM and B > 0
    BM = int(block_rows)
    assert BM % 128 == 0, "block_rows must be a multiple of 128 (lane-dense output)"

    num_blocks = pl.cdiv(B, BM)
    B_pad = num_blocks * BM

    cdt = jnp.bfloat16 if use_bf16 else jnp.float32

    # Batch padding (only when B is not a multiple of BM; production batches
    # should already be multiples so this copy is normally skipped).
    x_p = x if B_pad == B else jnp.pad(x, ((0, B_pad - B), (0, 0)))
    # For the full bf16 DMA saving, x should ideally already arrive in bf16
    # from the producer (e.g. the generator); the cast here is still a net win
    # for the resident weights.
    x_p = x_p.astype(cdt)

    flat_args = [x_p]
    in_specs = [pl.BlockSpec((BM, IMG_DIM), lambda i: (i, 0))]

    # Layer 1: weight pre-transposed to (in, out); bias as a (1, out) row.
    w1, b1 = params[0]
    w1_t = jnp.transpose(w1).astype(cdt)                  # (784, 128)
    b1_r = b1.reshape(1, -1).astype(jnp.float32)          # (1, 128)
    flat_args += [w1_t, b1_r]
    in_specs += [pl.BlockSpec(w1_t.shape, lambda i: (0, 0)),
                 pl.BlockSpec(b1_r.shape, lambda i: (0, 0))]

    # Layers 2-4: keep PyTorch (out, in) layout (feature-major math); column biases.
    for (w, b) in params[1:-1]:
        w_k = w.astype(cdt)                               # (out, in)
        b_k = b.reshape(-1, 1).astype(jnp.float32)        # (out, 1)
        flat_args += [w_k, b_k]
        in_specs += [pl.BlockSpec(w_k.shape, lambda i: (0, 0)),
                     pl.BlockSpec(b_k.shape, lambda i: (0, 0))]

    # Layer 5 (8 -> 1) runs on the VPU in f32: pass as (8, 1) column + (1, 1) bias.
    w5, b5 = params[-1]
    w5_c = jnp.transpose(w5).astype(jnp.float32)          # (8, 1)
    b5_r = b5.reshape(1, 1).astype(jnp.float32)           # (1, 1)
    flat_args += [w5_c, b5_r]
    in_specs += [pl.BlockSpec(w5_c.shape, lambda i: (0, 0)),
                 pl.BlockSpec(b5_r.shape, lambda i: (0, 0))]

    flops = int(2 * B_pad * sum(fi * fo for fi, fo in LAYER_DIMS))
    bytes_accessed = int(sum(int(a.size) * a.dtype.itemsize for a in flat_args)
                         + B_pad * 4)

    out = pl.pallas_call(
        disc_kernel,
        out_shape=jax.ShapeDtypeStruct((1, B_pad), jnp.float32),
        grid=(num_blocks,),
        in_specs=in_specs,
        out_specs=pl.BlockSpec((1, BM), lambda i: (0, i)),
        compiler_params=pltpu.CompilerParams(
            dimension_semantics=("parallel",)),
        cost_estimate=pl.CostEstimate(
            flops=flops, transcendentals=int(2 * B_pad),
            bytes_accessed=bytes_accessed),
    )(*flat_args)

    return out[0, :B].reshape(B, 1)


def init_params(key):
    """PyTorch nn.Linear default init: W (out,in), b (out,), U(+-1/sqrt(fan_in))."""
    params = []
    for (fan_in, fan_out) in LAYER_DIMS:
        key, kw, kb = jax.random.split(key, 3)
        bound = 1.0 / np.sqrt(fan_in)
        w = jax.random.uniform(kw, (fan_out, fan_in), jnp.float32,
                               minval=-bound, maxval=bound)
        b = jax.random.uniform(kb, (fan_out,), jnp.float32,
                               minval=-bound, maxval=bound)
        params.append((w, b))
    return params


def reference_forward(x, params):
    h = x
    n = len(params)
    for i, (w, b) in enumerate(params):
        h = h @ w.T + b
        if i < n - 1:
            h = jnp.where(h >= 0, h, 0.1 * h)
    return jax.nn.sigmoid(h)


if __name__ == "__main__":
    key = jax.random.PRNGKey(0)
    kx, kp = jax.random.split(key)

    B = 300                                  # not a multiple of BM -> tests padding path
    x = jax.random.normal(kx, (B, IMG_DIM), jnp.float32)
    params = init_params(kp)
    ref = np.asarray(reference_forward(x, params))

    # f32 path (tight tolerance; only deviation is the approx EUP reciprocal).
    out = jax.block_until_ready(
        discriminator_forward(x, params, block_rows=128, use_bf16=False))
    out_np = np.asarray(out)
    assert out_np.shape == (B, 1) and np.all(np.isfinite(out_np))
    np.testing.assert_allclose(out_np, ref, rtol=5e-3, atol=5e-3)

    # bf16 MXU-operand path (halved DMA traffic on v6e/v7x), looser tolerance.
    out_bf16 = jax.block_until_ready(
        discriminator_forward(x, params, block_rows=128, use_bf16=True))
    np.testing.assert_allclose(np.asarray(out_bf16), ref, rtol=5e-2, atol=5e-2)

    # Tiny batch (B < block) exercises the single-block / heavy-padding path.
    out_small = jax.block_until_ready(
        discriminator_forward(x[:8], params, block_rows=128, use_bf16=False))
    np.testing.assert_allclose(np.asarray(out_small), ref[:8], rtol=5e-3, atol=5e-3)

    print("KERNEL_OK")
</pallas_src>

<mosaic_0001>
module attributes {stable_mosaic.version = 11 : i64} {
  func.func @disc_kernel(%arg0: i32, %arg1: memref<128x784xf32, #tpu.memory_space<vmem>>, %arg2: memref<784x128xf32, #tpu.memory_space<vmem>>, %arg3: memref<1x128xf32, #tpu.memory_space<vmem>>, %arg4: memref<64x128xf32, #tpu.memory_space<vmem>>, %arg5: memref<64x1xf32, #tpu.memory_space<vmem>>, %arg6: memref<16x64xf32, #tpu.memory_space<vmem>>, %arg7: memref<16x1xf32, #tpu.memory_space<vmem>>, %arg8: memref<8x16xf32, #tpu.memory_space<vmem>>, %arg9: memref<8x1xf32, #tpu.memory_space<vmem>>, %arg10: memref<8x1xf32, #tpu.memory_space<vmem>>, %arg11: memref<1x1xf32, #tpu.memory_space<vmem>>, %arg12: memref<1x128xf32, #tpu.memory_space<vmem>>) attributes {dimension_semantics = [#tpu.dimension_semantics<parallel>], iteration_bounds = array<i64: 3>, scalar_prefetch = 0 : i64, scratch_operands = 0 : i64, tpu.core_type = #tpu.core_type<tc>, window_params = [{transform_indices = @transform_0, window_bounds = array<i64: 128, 784>}, {pipeline_mode = #tpu.pipeline_mode<synchronous>, transform_indices = @transform_1, window_bounds = array<i64: 784, 128>}, {pipeline_mode = #tpu.pipeline_mode<synchronous>, transform_indices = @transform_2, window_bounds = array<i64: 1, 128>}, {pipeline_mode = #tpu.pipeline_mode<synchronous>, transform_indices = @transform_3, window_bounds = array<i64: 64, 128>}, {pipeline_mode = #tpu.pipeline_mode<synchronous>, transform_indices = @transform_4, window_bounds = array<i64: 64, 1>}, {pipeline_mode = #tpu.pipeline_mode<synchronous>, transform_indices = @transform_5, window_bounds = array<i64: 16, 64>}, {pipeline_mode = #tpu.pipeline_mode<synchronous>, transform_indices = @transform_6, window_bounds = array<i64: 16, 1>}, {pipeline_mode = #tpu.pipeline_mode<synchronous>, transform_indices = @transform_7, window_bounds = array<i64: 8, 16>}, {pipeline_mode = #tpu.pipeline_mode<synchronous>, transform_indices = @transform_8, window_bounds = array<i64: 8, 1>}, {pipeline_mode = #tpu.pipeline_mode<synchronous>, transform_indices = @transform_9, window_bounds = array<i64: 8, 1>}, {pipeline_mode = #tpu.pipeline_mode<synchronous>, transform_indices = @transform_10, window_bounds = array<i64: 1, 1>}, {transform_indices = @transform_11, window_bounds = array<i64: 1, 128>}]} {
    %c0 = arith.constant 0 : index
    %c0_0 = arith.constant 0 : index
    %0 = vector.load %arg1[%c0, %c0_0] : memref<128x784xf32, #tpu.memory_space<vmem>>, vector<128x784xf32>
    %c0_1 = arith.constant 0 : index
    %c0_2 = arith.constant 0 : index
    %1 = vector.load %arg2[%c0_1, %c0_2] : memref<784x128xf32, #tpu.memory_space<vmem>>, vector<784x128xf32>
    %cst = arith.constant dense<0.000000e+00> : vector<128x128xf32>
    %2 = tpu.matmul %0, %1, %cst {dimension_numbers = #tpu.dot_dimension_numbers<[1], [0], [0], [1], [0, 0, 1, 1], [], []>} : vector<128x784xf32>, vector<784x128xf32>, vector<128x128xf32> -> vector<128x128xf32>
    %c0_3 = arith.constant 0 : index
    %c0_4 = arith.constant 0 : index
    %3 = vector.load %arg3[%c0_3, %c0_4] : memref<1x128xf32, #tpu.memory_space<vmem>>, vector<1x128xf32>
    %4 = vector.broadcast %3 : vector<1x128xf32> to vector<128x128xf32>
    %5 = arith.addf %2, %4 : vector<128x128xf32>
    %cst_5 = arith.constant 0.000000e+00 : f32
    %6 = vector.broadcast %cst_5 : f32 to vector<128x128xf32>
    %7 = arith.cmpf oge, %5, %6 : vector<128x128xf32>
    %cst_6 = arith.constant 1.000000e-01 : f32
    %8 = vector.broadcast %cst_6 : f32 to vector<128x128xf32>
    %9 = arith.mulf %8, %5 : vector<128x128xf32>
    %10 = arith.select %7, %5, %9 : vector<128x128xi1>, vector<128x128xf32>
    %11 = tpu.transpose %10, [1, 0] : vector<128x128xf32> -> vector<128x128xf32>
    %c0_7 = arith.constant 0 : index
    %c0_8 = arith.constant 0 : index
    %12 = vector.load %arg4[%c0_7, %c0_8] : memref<64x128xf32, #tpu.memory_space<vmem>>, vector<64x128xf32>
    %cst_9 = arith.constant dense<0.000000e+00> : vector<64x128xf32>
    %13 = tpu.matmul %12, %11, %cst_9 {dimension_numbers = #tpu.dot_dimension_numbers<[1], [0], [0], [1], [0, 0, 1, 1], [], []>} : vector<64x128xf32>, vector<128x128xf32>, vector<64x128xf32> -> vector<64x128xf32>
    %c0_10 = arith.constant 0 : index
    %c0_11 = arith.constant 0 : index
    %14 = vector.load %arg5[%c0_10, %c0_11] : memref<64x1xf32, #tpu.memory_space<vmem>>, vector<64x1xf32>
    %15 = vector.broadcast %14 : vector<64x1xf32> to vector<64x128xf32>
    %16 = arith.addf %13, %15 : vector<64x128xf32>
    %cst_12 = arith.constant 0.000000e+00 : f32
    %17 = vector.broadcast %cst_12 : f32 to vector<64x128xf32>
    %18 = arith.cmpf oge, %16, %17 : vector<64x128xf32>
    %cst_13 = arith.constant 1.000000e-01 : f32
    %19 = vector.broadcast %cst_13 : f32 to vector<64x128xf32>
    %20 = arith.mulf %19, %16 : vector<64x128xf32>
    %21 = arith.select %18, %16, %20 : vector<64x128xi1>, vector<64x128xf32>
    %c0_14 = arith.constant 0 : index
    %c0_15 = arith.constant 0 : index
    %22 = vector.load %arg6[%c0_14, %c0_15] : memref<16x64xf32, #tpu.memory_space<vmem>>, vector<16x64xf32>
    %cst_16 = arith.constant dense<0.000000e+00> : vector<16x128xf32>
    %23 = tpu.matmul %22, %21, %cst_16 {dimension_numbers = #tpu.dot_dimension_numbers<[1], [0], [0], [1], [0, 0, 1, 1], [], []>} : vector<16x64xf32>, vector<64x128xf32>, vector<16x128xf32> -> vector<16x128xf32>
    %c0_17 = arith.constant 0 : index
    %c0_18 = arith.constant 0 : index
    %24 = vector.load %arg7[%c0_17, %c0_18] : memref<16x1xf32, #tpu.memory_space<vmem>>, vector<16x1xf32>
    %25 = vector.broadcast %24 : vector<16x1xf32> to vector<16x128xf32>
    %26 = arith.addf %23, %25 : vector<16x128xf32>
    %cst_19 = arith.constant 0.000000e+00 : f32
    %27 = vector.broadcast %cst_19 : f32 to vector<16x128xf32>
    %28 = arith.cmpf oge, %26, %27 : vector<16x128xf32>
    %cst_20 = arith.constant 1.000000e-01 : f32
    %29 = vector.broadcast %cst_20 : f32 to vector<16x128xf32>
    %30 = arith.mulf %29, %26 : vector<16x128xf32>
    %31 = arith.select %28, %26, %30 : vector<16x128xi1>, vector<16x128xf32>
    %c0_21 = arith.constant 0 : index
    %c0_22 = arith.constant 0 : index
    %32 = vector.load %arg8[%c0_21, %c0_22] : memref<8x16xf32, #tpu.memory_space<vmem>>, vector<8x16xf32>
    %cst_23 = arith.constant dense<0.000000e+00> : vector<8x128xf32>
    %33 = tpu.matmul %32, %31, %cst_23 {dimension_numbers = #tpu.dot_dimension_numbers<[1], [0], [0], [1], [0, 0, 1, 1], [], []>} : vector<8x16xf32>, vector<16x128xf32>, vector<8x128xf32> -> vector<8x128xf32>
    %c0_24 = arith.constant 0 : index
    %c0_25 = arith.constant 0 : index
    %34 = vector.load %arg9[%c0_24, %c0_25] : memref<8x1xf32, #tpu.memory_space<vmem>>, vector<8x1xf32>
    %35 = vector.broadcast %34 : vector<8x1xf32> to vector<8x128xf32>
    %36 = arith.addf %33, %35 : vector<8x128xf32>
    %cst_26 = arith.constant 0.000000e+00 : f32
    %37 = vector.broadcast %cst_26 : f32 to vector<8x128xf32>
    %38 = arith.cmpf oge, %36, %37 : vector<8x128xf32>
    %cst_27 = arith.constant 1.000000e-01 : f32
    %39 = vector.broadcast %cst_27 : f32 to vector<8x128xf32>
    %40 = arith.mulf %39, %36 : vector<8x128xf32>
    %41 = arith.select %38, %36, %40 : vector<8x128xi1>, vector<8x128xf32>
    %c0_28 = arith.constant 0 : index
    %c0_29 = arith.constant 0 : index
    %42 = vector.load %arg10[%c0_28, %c0_29] : memref<8x1xf32, #tpu.memory_space<vmem>>, vector<8x1xf32>
    %43 = vector.broadcast %42 : vector<8x1xf32> to vector<8x128xf32>
    %44 = arith.mulf %41, %43 : vector<8x128xf32>
    %cst_30 = arith.constant dense<0.000000e+00> : vector<128xf32>
    %45 = vector.multi_reduction <add>, %44, %cst_30 [0] : vector<8x128xf32> to vector<128xf32>
    %46 = vector.shape_cast %45 : vector<128xf32> to vector<1x128xf32>
    %c0_31 = arith.constant 0 : index
    %c0_32 = arith.constant 0 : index
    %47 = vector.load %arg11[%c0_31, %c0_32] : memref<1x1xf32, #tpu.memory_space<vmem>>, vector<1x1xf32>
    %48 = vector.broadcast %47 : vector<1x1xf32> to vector<1x128xf32>
    %49 = arith.addf %46, %48 : vector<1x128xf32>
    %cst_33 = arith.constant 0.000000e+00 : f32
    %50 = vector.broadcast %cst_33 : f32 to vector<1x128xf32>
    %51 = arith.subf %50, %49 : vector<1x128xf32>
    %52 = math.exp %51 : vector<1x128xf32>
    %cst_34 = arith.constant 1.000000e+00 : f32
    %53 = vector.broadcast %cst_34 : f32 to vector<1x128xf32>
    %54 = arith.addf %53, %52 : vector<1x128xf32>
    %55 = tpu.reciprocal %54 {approx = true} : vector<1x128xf32> -> vector<1x128xf32>
    %c0_35 = arith.constant 0 : index
    %c0_36 = arith.constant 0 : index
    %56 = vector.load %arg12[%c0_35, %c0_36] : memref<1x128xf32, #tpu.memory_space<vmem>>, vector<1x128xf32>
    tpu.vector_store %arg12[%c0_35, %c0_36], %55 {strides = array<i32>} : memref<1x128xf32, #tpu.memory_space<vmem>>, vector<1x128xf32>,
    return
  }
  func.func @transform_0(%arg0: i32) -> (i32, i32) {
    %c0_i32 = arith.constant 0 : i32
    %c0_i32_0 = arith.constant 0 : i32
    return %arg0, %c0_i32 : i32, i32
  }
  func.func @transform_1(%arg0: i32) -> (i32, i32) {
    %c0_i32 = arith.constant 0 : i32
    %c0_i32_0 = arith.constant 0 : i32
    %c0_i32_1 = arith.constant 0 : i32
    return %c0_i32, %c0_i32_0 : i32, i32
  }
  func.func @transform_2(%arg0: i32) -> (i32, i32) {
    %c0_i32 = arith.constant 0 : i32
    %c0_i32_0 = arith.constant 0 : i32
    %c0_i32_1 = arith.constant 0 : i32
    return %c0_i32, %c0_i32_0 : i32, i32
  }
  func.func @transform_3(%arg0: i32) -> (i32, i32) {
    %c0_i32 = arith.constant 0 : i32
    %c0_i32_0 = arith.constant 0 : i32
    %c0_i32_1 = arith.constant 0 : i32
    return %c0_i32, %c0_i32_0 : i32, i32
  }
  func.func @transform_4(%arg0: i32) -> (i32, i32) {
    %c0_i32 = arith.constant 0 : i32
    %c0_i32_0 = arith.constant 0 : i32
    %c0_i32_1 = arith.constant 0 : i32
    return %c0_i32, %c0_i32_0 : i32, i32
  }
  func.func @transform_5(%arg0: i32) -> (i32, i32) {
    %c0_i32 = arith.constant 0 : i32
    %c0_i32_0 = arith.constant 0 : i32
    %c0_i32_1 = arith.constant 0 : i32
    return %c0_i32, %c0_i32_0 : i32, i32
  }
  func.func @transform_6(%arg0: i32) -> (i32, i32) {
    %c0_i32 = arith.constant 0 : i32
    %c0_i32_0 = arith.constant 0 : i32
    %c0_i32_1 = arith.constant 0 : i32
    return %c0_i32, %c0_i32_0 : i32, i32
  }
  func.func @transform_7(%arg0: i32) -> (i32, i32) {
    %c0_i32 = arith.constant 0 : i32
    %c0_i32_0 = arith.constant 0 : i32
    %c0_i32_1 = arith.constant 0 : i32
    return %c0_i32, %c0_i32_0 : i32, i32
  }
  func.func @transform_8(%arg0: i32) -> (i32, i32) {
    %c0_i32 = arith.constant 0 : i32
    %c0_i32_0 = arith.constant 0 : i32
    %c0_i32_1 = arith.constant 0 : i32
    return %c0_i32, %c0_i32_0 : i32, i32
  }
  func.func @transform_9(%arg0: i32) -> (i32, i32) {
    %c0_i32 = arith.constant 0 : i32
    %c0_i32_0 = arith.constant 0 : i32
    %c0_i32_1 = arith.constant 0 : i32
    return %c0_i32, %c0_i32_0 : i32, i32
  }
  func.func @transform_10(%arg0: i32) -> (i32, i32) {
    %c0_i32 = arith.constant 0 : i32
    %c0_i32_0 = arith.constant 0 : i32
    %c0_i32_1 = arith.constant 0 : i32
    return %c0_i32, %c0_i32_0 : i32, i32
  }
  func.func @transform_11(%arg0: i32) -> (i32, i32) {
    %c0_i32 = arith.constant 0 : i32
    %c0_i32_0 = arith.constant 0 : i32
    return %c0_i32, %arg0 : i32, i32
  }
}

</mosaic_0001>

<llo_original>
// kernel: discriminator_forward.1
$region0: #{discriminator_forward.1}
  #allocation0 [shape = 'u32[]', space=smem, size = 0x4, offset = 0x4, fixed_abs, tag = 'smem constant byte address 0x4 - core index']
  #allocation1 [shape = 'u32[144,128]{1,0:T(1,128)}', space=vmem, size = 0x12000, scoped, tag = 'internal scratch']
  #allocation2 [shape = 'f32[1,1]{1,0:T(1,128)S(1)}', space=vmem, size = 0x200, scoped, tag = 'scoped memory for discriminator_forward.1']
  %s0 = inlined_call_operand.vmem [shape: f32[384,784], index: 0, kind: input, shape index: {}]
  %s1 = inlined_call_operand.vmem [shape: f32[784,128], index: 1, kind: input, shape index: {}]
  %s2 = inlined_call_operand.vmem [shape: f32[1,128], index: 2, kind: input, shape index: {}]
  %s3 = inlined_call_operand.vmem [shape: f32[64,128], index: 3, kind: input, shape index: {}]
  %s4 = inlined_call_operand.vmem [shape: f32[64,1], index: 4, kind: input, shape index: {}]
  %s5 = inlined_call_operand.vmem [shape: f32[16,64], index: 5, kind: input, shape index: {}]
  %s6 = inlined_call_operand.vmem [shape: f32[16,1], index: 6, kind: input, shape index: {}]
  %s7 = inlined_call_operand.vmem [shape: f32[8,16], index: 7, kind: input, shape index: {}]
  %s8 = inlined_call_operand.vmem [shape: f32[8,1], index: 8, kind: input, shape index: {}]
  %s9 = inlined_call_operand.vmem [shape: f32[8,1], index: 9, kind: input, shape index: {}]
  %s10 = inlined_call_operand.<no memory space> [shape: f32[1,1], index: 10, kind: input, shape index: {}]
  %s11 = inlined_call_operand.vmem [shape: f32[1,384], index: 11, kind: output, shape index: {}]
  %s12 = sld [smem:[#allocation0]]
  $region77: #{discriminator_forward.1} parent=0
    _
  %s14 = ssub.s32 1, %s12
  %s15 = scalar_select 0, %s14, %s12
  %v16 = vstv %s10
  %17 = vst [vmem:[#allocation2] sm:$0x1] %v16
  loop: start=0, step=1, limit=5
  $region2: #{discriminator_forward.1} parent=0 // loop_pre_header
    _
  $region3: #{discriminator_forward.1} parent=0 // loop_header
    %s19 = sphi 0, %s23
    %p20 = scmp.ge.s32.totalorder %s19, 5
    %s29 = sphi 0, %s31
    %s32 = sphi 0, %s29
    %s33 = sphi 0, %s32
    %s49 = sphi 0, %s33
    %s53 = sphi 0, %s53
    %s55 = sphi 0, %s53
    %s56 = sphi 0, %s55
    %s70 = sphi 0, %s56
    %s74 = sphi 0, %s74
    %s76 = sphi 0, %s74
    %s77 = sphi 0, %s76
    %s91 = sphi 0, %s77
    %s95 = sphi 0, %s95
    %s97 = sphi 0, %s95
    %s98 = sphi 0, %s97
    %s112 = sphi 0, %s98
    %s116 = sphi 0, %s116
    %s118 = sphi 0, %s116
    %s119 = sphi 0, %s118
    %s133 = sphi 0, %s119
    %s137 = sphi 0, %s137
    %s139 = sphi 0, %s137
    %s140 = sphi 0, %s139
    %s154 = sphi 0, %s140
    %s158 = sphi 0, %s158
    %s160 = sphi 0, %s158
    %s161 = sphi 0, %s160
    %s175 = sphi 0, %s161
    %s179 = sphi 0, %s179
    %s181 = sphi 0, %s179
    %s182 = sphi 0, %s181
    %s196 = sphi 0, %s182
    %s200 = sphi 0, %s200
    %s202 = sphi 0, %s200
    %s203 = sphi 0, %s202
    %s217 = sphi 0, %s203
    %s221 = sphi 0, %s221
    %s223 = sphi 0, %s221
    %s224 = sphi 0, %s223
    %s238 = sphi 0, %s224
    %s242 = sphi 0, %s242
    %s244 = sphi 0, %s242
    %s245 = sphi 0, %s244
    %s259 = sphi 0, %s245
    %s265 = sphi 0, %s267
    %s268 = sphi 0, %s265
    %s269 = sphi 0, %s268
    %s285 = sphi 0, %s269
  $region4: #{discriminator_forward.1} parent=0 // loop_header_branch
    %22 = sbr.rel (%p20) target = $region8
  $region5: #{discriminator_forward.1} parent=0 // loop_body
    %s24 = ssub.s32 %s19, 1
    %s25 = ssub.s32 %s19, 2
    %s26 = sadd.s32 %s19, 1
    %s27 = ssub.s32 %s19, %s26
    %p28 = scmp.eq.s32.totalorder %s27, 0
    %s30 = sadd.s32 %s29, 1
    %s31 = scalar_select %p28, %s29, %s30
    %p34 = pneg %p28
    %p35 = scmp.eq.s32.totalorder %s19, 2
    %p36 = por %p34, %p35
    %p37 = scmp.ne.s32.totalorder %s29, %s32
    %p38 = scmp.eq.s32.totalorder %s19, 0
    %p39 = por %p37, %p38
    %p40 = scmp.ne.s32.totalorder %s29, %s32
    %p41 = scmp.eq.s32.totalorder %s24, 2
    %p42 = por %p40, %p41
    %p43 = scmp.ne.s32.totalorder %s32, %s33
    %p44 = scmp.eq.s32.totalorder %s24, 0
    %p45 = por %p43, %p44
    %p46 = scmp.ne.s32.totalorder %s32, %s33
    %p47 = scmp.eq.s32.totalorder %s25, 2
    %p48 = por %p46, %p47
    %p50 = scmp.ne.s32.totalorder %s33, %s49
    %p51 = scmp.eq.s32.totalorder %s25, 0
    %p52 = por %p50, %p51
    %s54 = sadd.s32 %s53, 1
    %p57 = scmp.eq.s32.totalorder %s19, 2
    %p58 = scmp.ne.s32.totalorder %s53, %s55
    %p59 = scmp.eq.s32.totalorder %s19, 0
    %p60 = por %p58, %p59
    %p61 = scmp.ne.s32.totalorder %s53, %s55
    %p62 = scmp.eq.s32.totalorder %s24, 2
    %p63 = por %p61, %p62
    %p64 = scmp.ne.s32.totalorder %s55, %s56
    %p65 = scmp.eq.s32.totalorder %s24, 0
    %p66 = por %p64, %p65
    %p67 = scmp.ne.s32.totalorder %s55, %s56
    %p68 = scmp.eq.s32.totalorder %s25, 2
    %p69 = por %p67, %p68
    %p71 = scmp.ne.s32.totalorder %s56, %s70
    %p72 = scmp.eq.s32.totalorder %s25, 0
    %p73 = por %p71, %p72
    %s75 = sadd.s32 %s74, 1
    %p78 = scmp.eq.s32.totalorder %s19, 2
    %p79 = scmp.ne.s32.totalorder %s74, %s76
    %p80 = scmp.eq.s32.totalorder %s19, 0
    %p81 = por %p79, %p80
    %p82 = scmp.ne.s32.totalorder %s74, %s76
    %p83 = scmp.eq.s32.totalorder %s24, 2
    %p84 = por %p82, %p83
    %p85 = scmp.ne.s32.totalorder %s76, %s77
    %p86 = scmp.eq.s32.totalorder %s24, 0
    %p87 = por %p85, %p86
    %p88 = scmp.ne.s32.totalorder %s76, %s77
    %p89 = scmp.eq.s32.totalorder %s25, 2
    %p90 = por %p88, %p89
    %p92 = scmp.ne.s32.totalorder %s77, %s91
    %p93 = scmp.eq.s32.totalorder %s25, 0
    %p94 = por %p92, %p93
    %s96 = sadd.s32 %s95, 1
    %p99 = scmp.eq.s32.totalorder %s19, 2
    %p100 = scmp.ne.s32.totalorder %s95, %s97
    %p101 = scmp.eq.s32.totalorder %s19, 0
    %p102 = por %p100, %p101
    %p103 = scmp.ne.s32.totalorder %s95, %s97
    %p104 = scmp.eq.s32.totalorder %s24, 2
    %p105 = por %p103, %p104
    %p106 = scmp.ne.s32.totalorder %s97, %s98
    %p107 = scmp.eq.s32.totalorder %s24, 0
    %p108 = por %p106, %p107
    %p109 = scmp.ne.s32.totalorder %s97, %s98
    %p110 = scmp.eq.s32.totalorder %s25, 2
    %p111 = por %p109, %p110
    %p113 = scmp.ne.s32.totalorder %s98, %s112
    %p114 = scmp.eq.s32.totalorder %s25, 0
    %p115 = por %p113, %p114
    %s117 = sadd.s32 %s116, 1
    %p120 = scmp.eq.s32.totalorder %s19, 2
    %p121 = scmp.ne.s32.totalorder %s116, %s118
    %p122 = scmp.eq.s32.totalorder %s19, 0
    %p123 = por %p121, %p122
    %p124 = scmp.ne.s32.totalorder %s116, %s118
    %p125 = scmp.eq.s32.totalorder %s24, 2
    %p126 = por %p124, %p125
    %p127 = scmp.ne.s32.totalorder %s118, %s119
    %p128 = scmp.eq.s32.totalorder %s24, 0
    %p129 = por %p127, %p128
    %p130 = scmp.ne.s32.totalorder %s118, %s119
    %p131 = scmp.eq.s32.totalorder %s25, 2
    %p132 = por %p130, %p131
    %p134 = scmp.ne.s32.totalorder %s119, %s133
    %p135 = scmp.eq.s32.totalorder %s25, 0
    %p136 = por %p134, %p135
    %s138 = sadd.s32 %s137, 1
    %p141 = scmp.eq.s32.totalorder %s19, 2
    %p142 = scmp.ne.s32.totalorder %s137, %s139
    %p143 = scmp.eq.s32.totalorder %s19, 0
    %p144 = por %p142, %p143
    %p145 = scmp.ne.s32.totalorder %s137, %s139
    %p146 = scmp.eq.s32.totalorder %s24, 2
    %p147 = por %p145, %p146
    %p148 = scmp.ne.s32.totalorder %s139, %s140
    %p149 = scmp.eq.s32.totalorder %s24, 0
    %p150 = por %p148, %p149
    %p151 = scmp.ne.s32.totalorder %s139, %s140
    %p152 = scmp.eq.s32.totalorder %s25, 2
    %p153 = por %p151, %p152
    %p155 = scmp.ne.s32.totalorder %s140, %s154
    %p156 = scmp.eq.s32.totalorder %s25, 0
    %p157 = por %p155, %p156
    %s159 = sadd.s32 %s158, 1
    %p162 = scmp.eq.s32.totalorder %s19, 2
    %p163 = scmp.ne.s32.totalorder %s158, %s160
    %p164 = scmp.eq.s32.totalorder %s19, 0
    %p165 = por %p163, %p164
    %p166 = scmp.ne.s32.totalorder %s158, %s160
    %p167 = scmp.eq.s32.totalorder %s24, 2
    %p168 = por %p166, %p167
    %p169 = scmp.ne.s32.totalorder %s160, %s161
    %p170 = scmp.eq.s32.totalorder %s24, 0
    %p171 = por %p169, %p170
    %p172 = scmp.ne.s32.totalorder %s160, %s161
    %p173 = scmp.eq.s32.totalorder %s25, 2
    %p174 = por %p172, %p173
    %p176 = scmp.ne.s32.totalorder %s161, %s175
    %p177 = scmp.eq.s32.totalorder %s25, 0
    %p178 = por %p176, %p177
    %s180 = sadd.s32 %s179, 1
    %p183 = scmp.eq.s32.totalorder %s19, 2
    %p184 = scmp.ne.s32.totalorder %s179, %s181
    %p185 = scmp.eq.s32.totalorder %s19, 0
    %p186 = por %p184, %p185
    %p187 = scmp.ne.s32.totalorder %s179, %s181
    %p188 = scmp.eq.s32.totalorder %s24, 2
    %p189 = por %p187, %p188
    %p190 = scmp.ne.s32.totalorder %s181, %s182
    %p191 = scmp.eq.s32.totalorder %s24, 0
    %p192 = por %p190, %p191
    %p193 = scmp.ne.s32.totalorder %s181, %s182
    %p194 = scmp.eq.s32.totalorder %s25, 2
    %p195 = por %p193, %p194
    %p197 = scmp.ne.s32.totalorder %s182, %s196
    %p198 = scmp.eq.s32.totalorder %s25, 0
    %p199 = por %p197, %p198
    %s201 = sadd.s32 %s200, 1
    %p204 = scmp.eq.s32.totalorder %s19, 2
    %p205 = scmp.ne.s32.totalorder %s200, %s202
    %p206 = scmp.eq.s32.totalorder %s19, 0
    %p207 = por %p205, %p206
    %p208 = scmp.ne.s32.totalorder %s200, %s202
    %p209 = scmp.eq.s32.totalorder %s24, 2
    %p210 = por %p208, %p209
    %p211 = scmp.ne.s32.totalorder %s202, %s203
    %p212 = scmp.eq.s32.totalorder %s24, 0
    %p213 = por %p211, %p212
    %p214 = scmp.ne.s32.totalorder %s202, %s203
    %p215 = scmp.eq.s32.totalorder %s25, 2
    %p216 = por %p214, %p215
    %p218 = scmp.ne.s32.totalorder %s203, %s217
    %p219 = scmp.eq.s32.totalorder %s25, 0
    %p220 = por %p218, %p219
    %s222 = sadd.s32 %s221, 1
    %p225 = scmp.eq.s32.totalorder %s19, 2
    %p226 = scmp.ne.s32.totalorder %s221, %s223
    %p227 = scmp.eq.s32.totalorder %s19, 0
    %p228 = por %p226, %p227
    %p229 = scmp.ne.s32.totalorder %s221, %s223
    %p230 = scmp.eq.s32.totalorder %s24, 2
    %p231 = por %p229, %p230
    %p232 = scmp.ne.s32.totalorder %s223, %s224
    %p233 = scmp.eq.s32.totalorder %s24, 0
    %p234 = por %p232, %p233
    %p235 = scmp.ne.s32.totalorder %s223, %s224
    %p236 = scmp.eq.s32.totalorder %s25, 2
    %p237 = por %p235, %p236
    %p239 = scmp.ne.s32.totalorder %s224, %s238
    %p240 = scmp.eq.s32.totalorder %s25, 0
    %p241 = por %p239, %p240
    %s243 = sadd.s32 %s242, 1
    %p246 = scmp.eq.s32.totalorder %s19, 2
    %p247 = scmp.ne.s32.totalorder %s242, %s244
    %p248 = scmp.eq.s32.totalorder %s19, 0
    %p249 = por %p247, %p248
    %p250 = scmp.ne.s32.totalorder %s242, %s244
    %p251 = scmp.eq.s32.totalorder %s24, 2
    %p252 = por %p250, %p251
    %p253 = scmp.ne.s32.totalorder %s244, %s245
    %p254 = scmp.eq.s32.totalorder %s24, 0
    %p255 = por %p253, %p254
    %p256 = scmp.ne.s32.totalorder %s244, %s245
    %p257 = scmp.eq.s32.totalorder %s25, 2
    %p258 = por %p256, %p257
    %p260 = scmp.ne.s32.totalorder %s245, %s259
    %p261 = scmp.eq.s32.totalorder %s25, 0
    %p262 = por %p260, %p261
    %s263 = ssub.s32 %s19, %s26
    %p264 = scmp.eq.s32.totalorder %s263, 0
    %s266 = sadd.s32 %s265, 1
    %s267 = scalar_select %p264, %s265, %s266
    %p270 = pneg %p264
    %p271 = scmp.eq.s32.totalorder %s19, 2
    %p272 = por %p270, %p271
    %p273 = scmp.ne.s32.totalorder %s265, %s268
    %p274 = scmp.eq.s32.totalorder %s19, 0
    %p275 = por %p273, %p274
    %p276 = scmp.ne.s32.totalorder %s265, %s268
    %p277 = scmp.eq.s32.totalorder %s24, 2
    %p278 = por %p276, %p277
    %p279 = scmp.ne.s32.totalorder %s268, %s269
    %p280 = scmp.eq.s32.totalorder %s24, 0
    %p281 = por %p279, %p280
    %p282 = scmp.ne.s32.totalorder %s268, %s269
    %p283 = scmp.eq.s32.totalorder %s25, 2
    %p284 = por %p282, %p283
    %p286 = scmp.ne.s32.totalorder %s269, %s285
    %p287 = scmp.eq.s32.totalorder %s25, 0
    %p288 = por %p286, %p287
    %p289 = scmp.le.s32.totalorder 1, %s19
    %p290 = scmp.lt.s32.totalorder %s19, 4
    %p291 = pnand %p289, %p290
    %p292 = pneg %p291
    // Predicated region
    $region9: #{discriminator_forward.1} parent=5 // pred_check
      _
    $region10: #{discriminator_forward.1} parent=5 // pred_check_branch
      %294 = sbr.rel (%p291) target = $region12
    $region11: #{discriminator_forward.1} parent=5 // pred_region
      %s295 = ssub.s32 %s19, 1
      // Predicated region
      $region13: #{discriminator_forward.1} parent=11 // pred_check
        %p296 = pneg %p66
      $region14: #{discriminator_forward.1} parent=11 // pred_check_branch
        %298 = sbr.rel (%p296) target = $region16
      $region15: #{discriminator_forward.1} parent=11 // pred_region
        _
      $region16: #{discriminator_forward.1} parent=11 // pred_fallthru
        _
      // Predicated region
      $region17: #{discriminator_forward.1} parent=11 // pred_check
        %p299 = pneg %p87
      $region18: #{discriminator_forward.1} parent=11 // pred_check_branch
        %301 = sbr.rel (%p299) target = $region20
      $region19: #{discriminator_forward.1} parent=11 // pred_region
        _
      $region20: #{discriminator_forward.1} parent=11 // pred_fallthru
        _
      // Predicated region
      $region21: #{discriminator_forward.1} parent=11 // pred_check
        %p302 = pneg %p108
      $region22: #{discriminator_forward.1} parent=11 // pred_check_branch
        %304 = sbr.rel (%p302) target = $region24
      $region23: #{discriminator_forward.1} parent=11 // pred_region
        _
      $region24: #{discriminator_forward.1} parent=11 // pred_fallthru
        _
      // Predicated region
      $region25: #{discriminator_forward.1} parent=11 // pred_check
        %p305 = pneg %p129
      $region26: #{discriminator_forward.1} parent=11 // pred_check_branch
        %307 = sbr.rel (%p305) target = $region28
      $region27: #{discriminator_forward.1} parent=11 // pred_region
        _
      $region28: #{discriminator_forward.1} parent=11 // pred_fallthru
        _
      // Predicated region
      $region29: #{discriminator_forward.1} parent=11 // pred_check
        %p308 = pneg %p150
      $region30: #{discriminator_forward.1} parent=11 // pred_check_branch
        %310 = sbr.rel (%p308) target = $region32
      $region31: #{discriminator_forward.1} parent=11 // pred_region
        _
      $region32: #{discriminator_forward.1} parent=11 // pred_fallthru
        _
      // Predicated region
      $region33: #{discriminator_forward.1} parent=11 // pred_check
        %p311 = pneg %p171
      $region34: #{discriminator_forward.1} parent=11 // pred_check_branch
        %313 = sbr.rel (%p311) target = $region36
      $region35: #{discriminator_forward.1} parent=11 // pred_region
        _
      $region36: #{discriminator_forward.1} parent=11 // pred_fallthru
        _
      // Predicated region
      $region37: #{discriminator_forward.1} parent=11 // pred_check
        %p314 = pneg %p192
      $region38: #{discriminator_forward.1} parent=11 // pred_check_branch
        %316 = sbr.rel (%p314) target = $region40
      $region39: #{discriminator_forward.1} parent=11 // pred_region
        _
      $region40: #{discriminator_forward.1} parent=11 // pred_fallthru
        _
      // Predicated region
      $region41: #{discriminator_forward.1} parent=11 // pred_check
        %p317 = pneg %p213
      $region42: #{discriminator_forward.1} parent=11 // pred_check_branch
        %319 = sbr.rel (%p317) target = $region44
      $region43: #{discriminator_forward.1} parent=11 // pred_region
        _
      $region44: #{discriminator_forward.1} parent=11 // pred_fallthru
        _
      // Predicated region
      $region45: #{discriminator_forward.1} parent=11 // pred_check
        %p320 = pneg %p234
      $region46: #{discriminator_forward.1} parent=11 // pred_check_branch
        %322 = sbr.rel (%p320) target = $region48
      $region47: #{discriminator_forward.1} parent=11 // pred_region
        _
      $region48: #{discriminator_forward.1} parent=11 // pred_fallthru
        _
      // Predicated region
      $region49: #{discriminator_forward.1} parent=11 // pred_check
        %p323 = pneg %p255
      $region50: #{discriminator_forward.1} parent=11 // pred_check_branch
        %325 = sbr.rel (%p323) target = $region52
      $region51: #{discriminator_forward.1} parent=11 // pred_region
        _
      $region52: #{discriminator_forward.1} parent=11 // pred_fallthru
        _
    $region12: #{discriminator_forward.1} parent=5 // pred_fallthru
      _
    %p326 = scmp.lt.s32.totalorder %s19, 3
    // Predicated region
    $region53: #{discriminator_forward.1} parent=5 // pred_check
      %p327 = pneg %p326
    $region54: #{discriminator_forward.1} parent=5 // pred_check_branch
      %329 = sbr.rel (%p327) target = $region56
    $region55: #{discriminator_forward.1} parent=5 // pred_region
      // Predicated region
      $region57: #{discriminator_forward.1} parent=55 // pred_check
        %p330 = pneg %p39
      $region58: #{discriminator_forward.1} parent=55 // pred_check_branch
        %332 = sbr.rel (%p330) target = $region60
      $region59: #{discriminator_forward.1} parent=55 // pred_region
        %s333 = smul.u32 16, %s19
        %p334 = scmp.lt.s32.totalorder %s333, 47
        %s335 = scalar_select %p334, %s333, 47
        %s336 = smul.addr %s335, 7
        %s337 = smul.addr %s336, 8
        %s338 = scalar_lea.vmem %s0, %s337
        %s339 = smul.u32 16, %s19
      $region60: #{discriminator_forward.1} parent=55 // pred_fallthru
        _
    $region56: #{discriminator_forward.1} parent=5 // pred_fallthru
      _
    %p340 = scmp.le.s32.totalorder 1, %s19
    %p341 = scmp.lt.s32.totalorder %s19, 4
    %p342 = pnand %p340, %p341
    %p343 = pneg %p342
    // Predicated region
    $region61: #{discriminator_forward.1} parent=5 // pred_check
      _
    $region62: #{discriminator_forward.1} parent=5 // pred_check_branch
      %345 = sbr.rel (%p342) target = $region64
    $region63: #{discriminator_forward.1} parent=5 // pred_region
      %s346 = ssub.s32 %s19, 1
      %s347 = smul.u32 16, %s24
      %p348 = scmp.lt.s32.totalorder %s347, 47
      %s349 = scalar_select %p348, %s347, 47
      %s350 = smul.addr %s349, 7
      %s351 = smul.addr %s350, 8
      %s352 = scalar_lea.vmem %s0, %s351
      %p353 = pneg %p45
      %p354 = pneg %p42
      %p355 = pneg %p66
      %p356 = pneg %p63
      %p357 = pneg %p87
      %p358 = pneg %p84
      %p359 = pneg %p108
      %p360 = pneg %p105
      %p361 = pneg %p129
      %p362 = pneg %p126
      %p363 = pneg %p150
      %p364 = pneg %p147
      %p365 = pneg %p171
      %p366 = pneg %p168
      %p367 = pneg %p192
      %p368 = pneg %p189
      %p369 = pneg %p213
      %p370 = pneg %p210
      %p371 = pneg %p234
      %p372 = pneg %p231
      %p373 = pneg %p255
      %p374 = pneg %p252
      %p375 = pneg %p281
      %p376 = pneg %p278
      %p377 = scmp.lt.s32.totalorder %s24, 2
      %s378 = scalar_select %p377, %s24, 2
      %s379 = scalar_lea.vmem %s11, %s378
      %s380 = smul.u32 16, %s24
      %p381 = scmp.lt.s32.totalorder %s380, 47
      %s382 = scalar_select %p381, %s380, 47
      %s383 = smul.addr %s382, 7
      %s384 = smul.addr %s383, 8
      %s385 = scalar_lea.vmem %s0, %s384
      %s386 = smul.u32 16, %s24
      %p387 = scmp.lt.s32.totalorder %s24, 2
      %s388 = scalar_select %p387, %s24, 2
      %s389 = scalar_lea.vmem %s11, %s388
      %v390 = vld [vmem:[%s385] sm:$0xff]
      %v391 = vld [vmem:[%s385 + $0x8] sm:$0xff]
      %v392 = vld [vmem:[%s385 + $0x10] sm:$0xff]
      %v393 = vld [vmem:[%s385 + $0x18] sm:$0xff]
      %v394 = vld [vmem:[%s385 + $0x20] sm:$0xff]
      %v395 = vld [vmem:[%s385 + $0x28] sm:$0xff]
      %v396 = vld [vmem:[%s385 + $0x30] sm:$0xff]
      %v397 = vld [vmem:[%s385 + $0x38] sm:$0xff]
      %v398 = vld [vmem:[%s385 + $0x40] sm:$0xff]
      %v399 = vld [vmem:[%s385 + $0x48] sm:$0xff]
      %v400 = vld [vmem:[%s385 + $0x50] sm:$0xff]
      %v401 = vld [vmem:[%s385 + $0x58] sm:$0xff]
      %v402 = vld [vmem:[%s385 + $0x60] sm:$0xff]
      %v403 = vld [vmem:[%s385 + $0x68] sm:$0xff]
      %v404 = vld [vmem:[%s385 + $0x70] sm:$0xff]
      %v405 = vld [vmem:[%s385 + $0x78] sm:$0xff]
      %v406 = vld [vmem:[%s385 + $0x80] sm:$0xff]
      %v407 = vld [vmem:[%s385 + $0x88] sm:$0xff]
      %v408 = vld [vmem:[%s385 + $0x90] sm:$0xff]
      %v409 = vld [vmem:[%s385 + $0x98] sm:$0xff]
      %v410 = vld [vmem:[%s385 + $0xa0] sm:$0xff]
      %v411 = vld [vmem:[%s385 + $0xa8] sm:$0xff]
      %v412 = vld [vmem:[%s385 + $0xb0] sm:$0xff]
      %v413 = vld [vmem:[%s385 + $0xb8] sm:$0xff]
      %v414 = vld [vmem:[%s385 + $0xc0] sm:$0xff]
      %v415 = vld [vmem:[%s385 + $0xc8] sm:$0xff]
      %v416 = vld [vmem:[%s385 + $0xd0] sm:$0xff]
      %v417 = vld [vmem:[%s385 + $0xd8] sm:$0xff]
      %v418 = vld [vmem:[%s385 + $0xe0] sm:$0xff]
      %v419 = vld [vmem:[%s385 + $0xe8] sm:$0xff]
      %v420 = vld [vmem:[%s385 + $0xf0] sm:$0xff]
      %v421 = vld [vmem:[%s385 + $0xf8] sm:$0xff]
      %v422 = vld [vmem:[%s385 + $0x100] sm:$0xff]
      %v423 = vld [vmem:[%s385 + $0x108] sm:$0xff]
      %v424 = vld [vmem:[%s385 + $0x110] sm:$0xff]
      %v425 = vld [vmem:[%s385 + $0x118] sm:$0xff]
      %v426 = vld [vmem:[%s385 + $0x120] sm:$0xff]
      %v427 = vld [vmem:[%s385 + $0x128] sm:$0xff]
      %v428 = vld [vmem:[%s385 + $0x130] sm:$0xff]
      %v429 = vld [vmem:[%s385 + $0x138] sm:$0xff]
      %v430 = vld [vmem:[%s385 + $0x140] sm:$0xff]
      %v431 = vld [vmem:[%s385 + $0x148] sm:$0xff]
      %v432 = vld [vmem:[%s385 + $0x150] sm:$0xff]
      %v433 = vld [vmem:[%s385 + $0x158] sm:$0xff]
      %v434 = vld [vmem:[%s385 + $0x160] sm:$0xff]
      %v435 = vld [vmem:[%s385 + $0x168] sm:$0xff]
      %v436 = vld [vmem:[%s385 + $0x170] sm:$0xff]
      %v437 = vld [vmem:[%s385 + $0x178] sm:$0xff]
      %v438 = vld [vmem:[%s385 + $0x180] sm:$0xff]
      %v439 = vld [vmem:[%s385 + $0x188] sm:$0xff]
      %v440 = vld [vmem:[%s385 + $0x190] sm:$0xff]
      %v441 = vld [vmem:[%s385 + $0x198] sm:$0xff]
      %v442 = vld [vmem:[%s385 + $0x1a0] sm:$0xff]
      %v443 = vld [vmem:[%s385 + $0x1a8] sm:$0xff]
      %v444 = vld [vmem:[%s385 + $0x1b0] sm:$0xff]
      %v445 = vld [vmem:[%s385 + $0x1b8] sm:$0xff]
      %v446 = vld [vmem:[%s385 + $0x1c0] sm:$0xff]
      %v447 = vld [vmem:[%s385 + $0x1c8] sm:$0xff]
      %v448 = vld [vmem:[%s385 + $0x1d0] sm:$0xff]
      %v449 = vld [vmem:[%s385 + $0x1d8] sm:$0xff]
      %v450 = vld [vmem:[%s385 + $0x1e0] sm:$0xff]
      %v451 = vld [vmem:[%s385 + $0x1e8] sm:$0xff]
      %v452 = vld [vmem:[%s385 + $0x1f0] sm:$0xff]
      %v453 = vld [vmem:[%s385 + $0x1f8] sm:$0xff]
      %v454 = vld [vmem:[%s385 + $0x200] sm:$0xff]
      %v455 = vld [vmem:[%s385 + $0x208] sm:$0xff]
      %v456 = vld [vmem:[%s385 + $0x210] sm:$0xff]
      %v457 = vld [vmem:[%s385 + $0x218] sm:$0xff]
      %v458 = vld [vmem:[%s385 + $0x220] sm:$0xff]
      %v459 = vld [vmem:[%s385 + $0x228] sm:$0xff]
      %v460 = vld [vmem:[%s385 + $0x230] sm:$0xff]
      %v461 = vld [vmem:[%s385 + $0x238] sm:$0xff]
      %v462 = vld [vmem:[%s385 + $0x240] sm:$0xff]
      %v463 = vld [vmem:[%s385 + $0x248] sm:$0xff]
      %v464 = vld [vmem:[%s385 + $0x250] sm:$0xff]
      %v465 = vld [vmem:[%s385 + $0x258] sm:$0xff]
      %v466 = vld [vmem:[%s385 + $0x260] sm:$0xff]
      %v467 = vld [vmem:[%s385 + $0x268] sm:$0xff]
      %v468 = vld [vmem:[%s385 + $0x270] sm:$0xff]
      %v469 = vld [vmem:[%s385 + $0x278] sm:$0xff]
      %v470 = vld [vmem:[%s385 + $0x280] sm:$0xff]
      %v471 = vld [vmem:[%s385 + $0x288] sm:$0xff]
      %v472 = vld [vmem:[%s385 + $0x290] sm:$0xff]
      %v473 = vld [vmem:[%s385 + $0x298] sm:$0xff]
      %v474 = vld [vmem:[%s385 + $0x2a0] sm:$0xff]
      %v475 = vld [vmem:[%s385 + $0x2a8] sm:$0xff]
      %v476 = vld [vmem:[%s385 + $0x2b0] sm:$0xff]
      %v477 = vld [vmem:[%s385 + $0x2b8] sm:$0xff]
      %v478 = vld [vmem:[%s385 + $0x2c0] sm:$0xff]
      %v479 = vld [vmem:[%s385 + $0x2c8] sm:$0xff]
      %v480 = vld [vmem:[%s385 + $0x2d0] sm:$0xff]
      %v481 = vld [vmem:[%s385 + $0x2d8] sm:$0xff]
      %v482 = vld [vmem:[%s385 + $0x2e0] sm:$0xff]
      %v483 = vld [vmem:[%s385 + $0x2e8] sm:$0xff]
      %v484 = vld [vmem:[%s385 + $0x2f0] sm:$0xff]
      %v485 = vld [vmem:[%s385 + $0x2f8] sm:$0xff]
      %v486 = vld [vmem:[%s385 + $0x300] sm:$0xff]
      %v487 = vld [vmem:[%s385 + $0x308] sm:$0xff]
      %v488 = vld [vmem:[%s385 + $0x310] sm:$0xff]
      %v489 = vld [vmem:[%s385 + $0x318] sm:$0xff]
      %v490 = vld [vmem:[%s385 + $0x320] sm:$0xff]
      %v491 = vld [vmem:[%s385 + $0x328] sm:$0xff]
      %v492 = vld [vmem:[%s385 + $0x330] sm:$0xff]
      %v493 = vld [vmem:[%s385 + $0x338] sm:$0xff]
      %v494 = vld [vmem:[%s385 + $0x340] sm:$0xff]
      %v495 = vld [vmem:[%s385 + $0x348] sm:$0xff]
      %v496 = vld [vmem:[%s385 + $0x350] sm:$0xff]
      %v497 = vld [vmem:[%s385 + $0x358] sm:$0xff]
      %v498 = vld [vmem:[%s385 + $0x360] sm:$0xff]
      %v499 = vld [vmem:[%s385 + $0x368] sm:$0xff]
      %v500 = vld [vmem:[%s385 + $0x370] sm:$0xff]
      %v501 = vld [vmem:[%s385 + $0x378] sm:$0xff]
      %v502 = vld [vmem:[%s1] sm:$0xff]
      %v503 = vld [vmem:[%s1 + $0x8] sm:$0xff]
      %v504 = vld [vmem:[%s1 + $0x10] sm:$0xff]
      %v505 = vld [vmem:[%s1 + $0x18] sm:$0xff]
      %v506 = vld [vmem:[%s1 + $0x20] sm:$0xff]
      %v507 = vld [vmem:[%s1 + $0x28] sm:$0xff]
      %v508 = vld [vmem:[%s1 + $0x30] sm:$0xff]
      %v509 = vld [vmem:[%s1 + $0x38] sm:$0xff]
      %v510 = vld [vmem:[%s1 + $0x40] sm:$0xff]
      %v511 = vld [vmem:[%s1 + $0x48] sm:$0xff]
      %v512 = vld [vmem:[%s1 + $0x50] sm:$0xff]
      %v513 = vld [vmem:[%s1 + $0x58] sm:$0xff]
      %v514 = vld [vmem:[%s1 + $0x60] sm:$0xff]
      %v515 = vld [vmem:[%s1 + $0x68] sm:$0xff]
      %v516 = vld [vmem:[%s1 + $0x70] sm:$0xff]
      %v517 = vld [vmem:[%s1 + $0x78] sm:$0xff]
      %v518 = vld [vmem:[%s1 + $0x80] sm:$0xff]
      %v519 = vld [vmem:[%s1 + $0x88] sm:$0xff]
      %v520 = vld [vmem:[%s1 + $0x90] sm:$0xff]
      %v521 = vld [vmem:[%s1 + $0x98] sm:$0xff]
      %v522 = vld [vmem:[%s1 + $0xa0] sm:$0xff]
      %v523 = vld [vmem:[%s1 + $0xa8] sm:$0xff]
      %v524 = vld [vmem:[%s1 + $0xb0] sm:$0xff]
      %v525 = vld [vmem:[%s1 + $0xb8] sm:$0xff]
      %v526 = vld [vmem:[%s1 + $0xc0] sm:$0xff]
      %v527 = vld [vmem:[%s1 + $0xc8] sm:$0xff]
      %v528 = vld [vmem:[%s1 + $0xd0] sm:$0xff]
      %v529 = vld [vmem:[%s1 + $0xd8] sm:$0xff]
      %v530 = vld [vmem:[%s1 + $0xe0] sm:$0xff]
      %v531 = vld [vmem:[%s1 + $0xe8] sm:$0xff]
      %v532 = vld [vmem:[%s1 + $0xf0] sm:$0xff]
      %v533 = vld [vmem:[%s1 + $0xf8] sm:$0xff]
      %v534 = vld [vmem:[%s1 + $0x100] sm:$0xff]
      %v535 = vld [vmem:[%s1 + $0x108] sm:$0xff]
      %v536 = vld [vmem:[%s1 + $0x110] sm:$0xff]
      %v537 = vld [vmem:[%s1 + $0x118] sm:$0xff]
      %v538 = vld [vmem:[%s1 + $0x120] sm:$0xff]
      %v539 = vld [vmem:[%s1 + $0x128] sm:$0xff]
      %v540 = vld [vmem:[%s1 + $0x130] sm:$0xff]
      %v541 = vld [vmem:[%s1 + $0x138] sm:$0xff]
      %v542 = vld [vmem:[%s1 + $0x140] sm:$0xff]
      %v543 = vld [vmem:[%s1 + $0x148] sm:$0xff]
      %v544 = vld [vmem:[%s1 + $0x150] sm:$0xff]
      %v545 = vld [vmem:[%s1 + $0x158] sm:$0xff]
      %v546 = vld [vmem:[%s1 + $0x160] sm:$0xff]
      %v547 = vld [vmem:[%s1 + $0x168] sm:$0xff]
      %v548 = vld [vmem:[%s1 + $0x170] sm:$0xff]
      %v549 = vld [vmem:[%s1 + $0x178] sm:$0xff]
      %v550 = vld [vmem:[%s1 + $0x180] sm:$0xff]
      %v551 = vld [vmem:[%s1 + $0x188] sm:$0xff]
      %v552 = vld [vmem:[%s1 + $0x190] sm:$0xff]
      %v553 = vld [vmem:[%s1 + $0x198] sm:$0xff]
      %v554 = vld [vmem:[%s1 + $0x1a0] sm:$0xff]
      %v555 = vld [vmem:[%s1 + $0x1a8] sm:$0xff]
      %v556 = vld [vmem:[%s1 + $0x1b0] sm:$0xff]
      %v557 = vld [vmem:[%s1 + $0x1b8] sm:$0xff]
      %v558 = vld [vmem:[%s1 + $0x1c0] sm:$0xff]
      %v559 = vld [vmem:[%s1 + $0x1c8] sm:$0xff]
      %v560 = vld [vmem:[%s1 + $0x1d0] sm:$0xff]
      %v561 = vld [vmem:[%s1 + $0x1d8] sm:$0xff]
      %v562 = vld [vmem:[%s1 + $0x1e0] sm:$0xff]
      %v563 = vld [vmem:[%s1 + $0x1e8] sm:$0xff]
      %v564 = vld [vmem:[%s1 + $0x1f0] sm:$0xff]
      %v565 = vld [vmem:[%s1 + $0x1f8] sm:$0xff]
      %v566 = vld [vmem:[%s1 + $0x200] sm:$0xff]
      %v567 = vld [vmem:[%s1 + $0x208] sm:$0xff]
      %v568 = vld [vmem:[%s1 + $0x210] sm:$0xff]
      %v569 = vld [vmem:[%s1 + $0x218] sm:$0xff]
      %v570 = vld [vmem:[%s1 + $0x220] sm:$0xff]
      %v571 = vld [vmem:[%s1 + $0x228] sm:$0xff]
      %v572 = vld [vmem:[%s1 + $0x230] sm:$0xff]
      %v573 = vld [vmem:[%s1 + $0x238] sm:$0xff]
      %v574 = vld [vmem:[%s1 + $0x240] sm:$0xff]
      %v575 = vld [vmem:[%s1 + $0x248] sm:$0xff]
      %v576 = vld [vmem:[%s1 + $0x250] sm:$0xff]
      %v577 = vld [vmem:[%s1 + $0x258] sm:$0xff]
      %v578 = vld [vmem:[%s1 + $0x260] sm:$0xff]
      %v579 = vld [vmem:[%s1 + $0x268] sm:$0xff]
      %v580 = vld [vmem:[%s1 + $0x270] sm:$0xff]
      %v581 = vld [vmem:[%s1 + $0x278] sm:$0xff]
      %v582 = vld [vmem:[%s1 + $0x280] sm:$0xff]
      %v583 = vld [vmem:[%s1 + $0x288] sm:$0xff]
      %v584 = vld [vmem:[%s1 + $0x290] sm:$0xff]
      %v585 = vld [vmem:[%s1 + $0x298] sm:$0xff]
      %v586 = vld [vmem:[%s1 + $0x2a0] sm:$0xff]
      %v587 = vld [vmem:[%s1 + $0x2a8] sm:$0xff]
      %v588 = vld [vmem:[%s1 + $0x2b0] sm:$0xff]
      %v589 = vld [vmem:[%s1 + $0x2b8] sm:$0xff]
      %v590 = vld [vmem:[%s1 + $0x2c0] sm:$0xff]
      %v591 = vld [vmem:[%s1 + $0x2c8] sm:$0xff]
      %v592 = vld [vmem:[%s1 + $0x2d0] sm:$0xff]
      %v593 = vld [vmem:[%s1 + $0x2d8] sm:$0xff]
      %v594 = vld [vmem:[%s1 + $0x2e0] sm:$0xff]
      %v595 = vld [vmem:[%s1 + $0x2e8] sm:$0xff]
      %v596 = vld [vmem:[%s1 + $0x2f0] sm:$0xff]
      %v597 = vld [vmem:[%s1 + $0x2f8] sm:$0xff]
      %v598 = vld [vmem:[%s1 + $0x300] sm:$0xff]
      %v599 = vld [vmem:[%s1 + $0x308] sm:$0xff]
      %v600 = vld [vmem:[%s2] sm:$0x1]
      %v602 = vlaneseq
      %v603 = vshrl.u32 %v602, 7
      %v604 = vsub.s32 0, %v603
      %v605 = vrot.slane %v600, %v604
      %vm607 = vcmask 130048
      %v609 = vsel %vm607, %v396, 0
      %v612 = vsel %vm607, %v403, 0
      %v615 = vsel %vm607, %v410, 0
      %v618 = vsel %vm607, %v417, 0
      %v621 = vsel %vm607, %v424, 0
      %v624 = vsel %vm607, %v431, 0
      %v627 = vsel %vm607, %v438, 0
      %v630 = vsel %vm607, %v445, 0
      %v633 = vsel %vm607, %v452, 0
      %v636 = vsel %vm607, %v459, 0
      %v639 = vsel %vm607, %v466, 0
      %v642 = vsel %vm607, %v473, 0
      %v645 = vsel %vm607, %v480, 0
      %v648 = vsel %vm607, %v487, 0
      %v651 = vsel %vm607, %v494, 0
      %v654 = vsel %vm607, %v501, 0
      %656 = vmatprep.subr.mxu0 0.0
      %657 = vmatpush1.msra.mxu0 %v517
      %658 = vmatprep.subr.mxu0 0.0
      %659 = vmatpush1.msra.mxu0 %v516
      %660 = vmatprep.subr.mxu0 0.0
      %661 = vmatpush1.msra.mxu0 %v515
      %662 = vmatprep.subr.mxu0 0.0
      %663 = vmatpush1.msra.mxu0 %v514
      %664 = vmatprep.subr.mxu0 0.0
      %665 = vmatpush1.msra.mxu0 %v513
      %666 = vmatprep.subr.mxu0 0.0
      %667 = vmatpush1.msra.mxu0 %v512
      %668 = vmatprep.subr.mxu0 0.0
      %669 = vmatpush1.msra.mxu0 %v511
      %670 = vmatprep.subr.mxu0 0.0
      %671 = vmatpush1.msra.mxu0 %v510
      %672 = vmatprep.subr.mxu0 0.0
      %673 = vmatpush1.msra.mxu0 %v509
      %674 = vmatprep.subr.mxu0 0.0
      %675 = vmatpush1.msra.mxu0 %v508
      %676 = vmatprep.subr.mxu0 0.0
      %677 = vmatpush1.msra.mxu0 %v507
      %678 = vmatprep.subr.mxu0 0.0
      %679 = vmatpush1.msra.mxu0 %v506
      %680 = vmatprep.subr.mxu0 0.0
      %681 = vmatpush1.msra.mxu0 %v505
      %682 = vmatprep.subr.mxu0 0.0
      %683 = vmatpush1.msra.mxu0 %v504
      %684 = vmatprep.subr.mxu0 0.0
      %685 = vmatpush1.msra.mxu0 %v503
      %686 = vmatprep.subr.mxu0 0.0
      %687 = vmatpush1.msra.mxu0 %v502
      %688 = vmatprep.subr.mxu0 0.0
      %689 = vmatpush2.msra.mxu0 %v533
      %690 = vmatprep.subr.mxu0 0.0
      %691 = vmatpush2.msra.mxu0 %v532
      %692 = vmatprep.subr.mxu0 0.0
      %693 = vmatpush2.msra.mxu0 %v531
      %694 = vmatprep.subr.mxu0 0.0
      %695 = vmatpush2.msra.mxu0 %v530
      %696 = vmatprep.subr.mxu0 0.0
      %697 = vmatpush2.msra.mxu0 %v529
      %698 = vmatprep.subr.mxu0 0.0
      %699 = vmatpush2.msra.mxu0 %v528
      %700 = vmatprep.subr.mxu0 0.0
      %701 = vmatpush2.msra.mxu0 %v527
      %702 = vmatprep.subr.mxu0 0.0
      %703 = vmatpush2.msra.mxu0 %v526
      %704 = vmatprep.subr.mxu0 0.0
      %705 = vmatpush2.msra.mxu0 %v525
      %706 = vmatprep.subr.mxu0 0.0
      %707 = vmatpush2.msra.mxu0 %v524
      %708 = vmatprep.subr.mxu0 0.0
      %709 = vmatpush2.msra.mxu0 %v523
      %710 = vmatprep.subr.mxu0 0.0
      %711 = vmatpush2.msra.mxu0 %v522
      %712 = vmatprep.subr.mxu0 0.0
      %713 = vmatpush2.msra.mxu0 %v521
      %714 = vmatprep.subr.mxu0 0.0
      %715 = vmatpush2.msra.mxu0 %v520
      %716 = vmatprep.subr.mxu0 0.0
      %717 = vmatpush2.msra.mxu0 %v519
      %718 = vmatprep.subr.mxu0 0.0
      %719 = vmatpush2.msra.mxu0 %v518
      %720 = vmatprep.mubr.f32.mxu0 %v391
      %721 = vmatmul.mubr.f32.gmra.mxu0 %v390
      %v722 = vpop.f32.mrf.mxu0
      %v723 = vadd.f32 %v605, %v722
      %v724 = vpop.f32.mrf.mxu0
      %725 = vmatprep.mubr.f32.mxu0 %v398
      %726 = vmatmul.mubr.f32.gmra.mxu0 %v397
      %v727 = vpop.f32.mrf.mxu0
      %v728 = vadd.f32 %v605, %v727
      %v729 = vpop.f32.mrf.mxu0
      %730 = vmatprep.mubr.f32.mxu0 %v405
      %731 = vmatmul.mubr.f32.gmra.mxu0 %v404
      %v732 = vpop.f32.mrf.mxu0
      %v733 = vadd.f32 %v605, %v732
      %v734 = vpop.f32.mrf.mxu0
      %735 = vmatprep.mubr.f32.mxu0 %v412
      %736 = vmatmul.mubr.f32.gmra.mxu0 %v411
      %v737 = vpop.f32.mrf.mxu0
      %v738 = vadd.f32 %v605, %v737
      %v739 = vpop.f32.mrf.mxu0
      %740 = vmatprep.mubr.f32.mxu0 %v419
      %741 = vmatmul.mubr.f32.gmra.mxu0 %v418
      %v742 = vpop.f32.mrf.mxu0
      %v743 = vadd.f32 %v605, %v742
      %v744 = vpop.f32.mrf.mxu0
      %745 = vmatprep.mubr.f32.mxu0 %v426
      %746 = vmatmul.mubr.f32.gmra.mxu0 %v425
      %v747 = vpop.f32.mrf.mxu0
      %v748 = vadd.f32 %v605, %v747
      %v749 = vpop.f32.mrf.mxu0
      %750 = vmatprep.mubr.f32.mxu0 %v433
      %751 = vmatmul.mubr.f32.gmra.mxu0 %v432
      %v752 = vpop.f32.mrf.mxu0
      %v753 = vadd.f32 %v605, %v752
      %v754 = vpop.f32.mrf.mxu0
      %755 = vmatprep.mubr.f32.mxu0 %v440
      %756 = vmatmul.mubr.f32.gmra.mxu0 %v439
      %v757 = vpop.f32.mrf.mxu0
      %v758 = vadd.f32 %v605, %v757
      %v759 = vpop.f32.mrf.mxu0
      %760 = vmatprep.mubr.f32.mxu0 %v447
      %761 = vmatmul.mubr.f32.gmra.mxu0 %v446
      %v762 = vpop.f32.mrf.mxu0
      %v763 = vadd.f32 %v605, %v762
      %v764 = vpop.f32.mrf.mxu0
      %765 = vmatprep.mubr.f32.mxu0 %v454
      %766 = vmatmul.mubr.f32.gmra.mxu0 %v453
      %v767 = vpop.f32.mrf.mxu0
      %v768 = vadd.f32 %v605, %v767
      %v769 = vpop.f32.mrf.mxu0
      %770 = vmatprep.mubr.f32.mxu0 %v461
      %771 = vmatmul.mubr.f32.gmra.mxu0 %v460
      %v772 = vpop.f32.mrf.mxu0
      %v773 = vadd.f32 %v605, %v772
      %v774 = vpop.f32.mrf.mxu0
      %775 = vmatprep.mubr.f32.mxu0 %v468
      %776 = vmatmul.mubr.f32.gmra.mxu0 %v467
      %v777 = vpop.f32.mrf.mxu0
      %v778 = vadd.f32 %v605, %v777
      %v779 = vpop.f32.mrf.mxu0
      %780 = vmatprep.mubr.f32.mxu0 %v475
      %781 = vmatmul.mubr.f32.gmra.mxu0 %v474
      %v782 = vpop.f32.mrf.mxu0
      %v783 = vadd.f32 %v605, %v782
      %v784 = vpop.f32.mrf.mxu0
      %785 = vmatprep.mubr.f32.mxu0 %v482
      %786 = vmatmul.mubr.f32.gmra.mxu0 %v481
      %v787 = vpop.f32.mrf.mxu0
      %v788 = vadd.f32 %v605, %v787
      %v789 = vpop.f32.mrf.mxu0
      %790 = vmatprep.mubr.f32.mxu0 %v489
      %791 = vmatmul.mubr.f32.gmra.mxu0 %v488
      %v792 = vpop.f32.mrf.mxu0
      %v793 = vadd.f32 %v605, %v792
      %v794 = vpop.f32.mrf.mxu0
      %795 = vmatprep.mubr.f32.mxu0 %v496
      %796 = vmatmul.mubr.f32.gmra.mxu0 %v495
      %v797 = vpop.f32.mrf.mxu0
      %v798 = vadd.f32 %v605, %v797
      %v799 = vpop.f32.mrf.mxu0
      %800 = vdwg.mxu0
      %801 = vmatprep.subr.mxu0 0.0
      %802 = vmatpush1.msra.mxu0 %v549
      %803 = vmatprep.subr.mxu0 0.0
      %804 = vmatpush1.msra.mxu0 %v548
      %805 = vmatprep.subr.mxu0 0.0
      %806 = vmatpush1.msra.mxu0 %v547
      %807 = vmatprep.subr.mxu0 0.0
      %808 = vmatpush1.msra.mxu0 %v546
      %809 = vmatprep.subr.mxu0 0.0
      %810 = vmatpush1.msra.mxu0 %v545
      %811 = vmatprep.subr.mxu0 0.0
      %812 = vmatpush1.msra.mxu0 %v544
      %813 = vmatprep.subr.mxu0 0.0
      %814 = vmatpush1.msra.mxu0 %v543
      %815 = vmatprep.subr.mxu0 0.0
      %816 = vmatpush1.msra.mxu0 %v542
      %817 = vmatprep.subr.mxu0 0.0
      %818 = vmatpush1.msra.mxu0 %v541
      %819 = vmatprep.subr.mxu0 0.0
      %820 = vmatpush1.msra.mxu0 %v540
      %821 = vmatprep.subr.mxu0 0.0
      %822 = vmatpush1.msra.mxu0 %v539
      %823 = vmatprep.subr.mxu0 0.0
      %824 = vmatpush1.msra.mxu0 %v538
      %825 = vmatprep.subr.mxu0 0.0
      %826 = vmatpush1.msra.mxu0 %v537
      %827 = vmatprep.subr.mxu0 0.0
      %828 = vmatpush1.msra.mxu0 %v536
      %829 = vmatprep.subr.mxu0 0.0
      %830 = vmatpush1.msra.mxu0 %v535
      %831 = vmatprep.subr.mxu0 0.0
      %832 = vmatpush1.msra.mxu0 %v534
      %833 = vmatprep.subr.mxu0 0.0
      %834 = vmatpush2.msra.mxu0 %v565
      %835 = vmatprep.subr.mxu0 0.0
      %836 = vmatpush2.msra.mxu0 %v564
      %837 = vmatprep.subr.mxu0 0.0
      %838 = vmatpush2.msra.mxu0 %v563
      %839 = vmatprep.subr.mxu0 0.0
      %840 = vmatpush2.msra.mxu0 %v562
      %841 = vmatprep.subr.mxu0 0.0
      %842 = vmatpush2.msra.mxu0 %v561
      %843 = vmatprep.subr.mxu0 0.0
      %844 = vmatpush2.msra.mxu0 %v560
      %845 = vmatprep.subr.mxu0 0.0
      %846 = vmatpush2.msra.mxu0 %v559
      %847 = vmatprep.subr.mxu0 0.0
      %848 = vmatpush2.msra.mxu0 %v558
      %849 = vmatprep.subr.mxu0 0.0
      %850 = vmatpush2.msra.mxu0 %v557
      %851 = vmatprep.subr.mxu0 0.0
      %852 = vmatpush2.msra.mxu0 %v556
      %853 = vmatprep.subr.mxu0 0.0
      %854 = vmatpush2.msra.mxu0 %v555
      %855 = vmatprep.subr.mxu0 0.0
      %856 = vmatpush2.msra.mxu0 %v554
      %857 = vmatprep.subr.mxu0 0.0
      %858 = vmatpush2.msra.mxu0 %v553
      %859 = vmatprep.subr.mxu0 0.0
      %860 = vmatpush2.msra.mxu0 %v552
      %861 = vmatprep.subr.mxu0 0.0
      %862 = vmatpush2.msra.mxu0 %v551
      %863 = vmatprep.subr.mxu0 0.0
      %864 = vmatpush2.msra.mxu0 %v550
      %865 = vmatprep.mubr.f32.mxu0 %v393
      %866 = vmatmul.mubr.f32.gmra.mxu0 %v392
      %v867 = vpop.f32.mrf.mxu0
      %v868 = vadd.f32 %v723, %v867
      %v869 = vpop.f32.mrf.mxu0
      %870 = vmatprep.mubr.f32.mxu0 %v400
      %871 = vmatmul.mubr.f32.gmra.mxu0 %v399
      %v872 = vpop.f32.mrf.mxu0
      %v873 = vadd.f32 %v728, %v872
      %v874 = vpop.f32.mrf.mxu0
      %875 = vmatprep.mubr.f32.mxu0 %v407
      %876 = vmatmul.mubr.f32.gmra.mxu0 %v406
      %v877 = vpop.f32.mrf.mxu0
      %v878 = vadd.f32 %v733, %v877
      %v879 = vpop.f32.mrf.mxu0
      %880 = vmatprep.mubr.f32.mxu0 %v414
      %881 = vmatmul.mubr.f32.gmra.mxu0 %v413
      %v882 = vpop.f32.mrf.mxu0
      %v883 = vadd.f32 %v738, %v882
      %v884 = vpop.f32.mrf.mxu0
      %885 = vmatprep.mubr.f32.mxu0 %v421
      %886 = vmatmul.mubr.f32.gmra.mxu0 %v420
      %v887 = vpop.f32.mrf.mxu0
      %v888 = vadd.f32 %v743, %v887
      %v889 = vpop.f32.mrf.mxu0
      %890 = vmatprep.mubr.f32.mxu0 %v428
      %891 = vmatmul.mubr.f32.gmra.mxu0 %v427
      %v892 = vpop.f32.mrf.mxu0
      %v893 = vadd.f32 %v748, %v892
      %v894 = vpop.f32.mrf.mxu0
      %895 = vmatprep.mubr.f32.mxu0 %v435
      %896 = vmatmul.mubr.f32.gmra.mxu0 %v434
      %v897 = vpop.f32.mrf.mxu0
      %v898 = vadd.f32 %v753, %v897
      %v899 = vpop.f32.mrf.mxu0
      %900 = vmatprep.mubr.f32.mxu0 %v442
      %901 = vmatmul.mubr.f32.gmra.mxu0 %v441
      %v902 = vpop.f32.mrf.mxu0
      %v903 = vadd.f32 %v758, %v902
      %v904 = vpop.f32.mrf.mxu0
      %905 = vmatprep.mubr.f32.mxu0 %v449
      %906 = vmatmul.mubr.f32.gmra.mxu0 %v448
      %v907 = vpop.f32.mrf.mxu0
      %v908 = vadd.f32 %v763, %v907
      %v909 = vpop.f32.mrf.mxu0
      %910 = vmatprep.mubr.f32.mxu0 %v456
      %911 = vmatmul.mubr.f32.gmra.mxu0 %v455
      %v912 = vpop.f32.mrf.mxu0
      %v913 = vadd.f32 %v768, %v912
      %v914 = vpop.f32.mrf.mxu0
      %915 = vmatprep.mubr.f32.mxu0 %v463
      %916 = vmatmul.mubr.f32.gmra.mxu0 %v462
      %v917 = vpop.f32.mrf.mxu0
      %v918 = vadd.f32 %v773, %v917
      %v919 = vpop.f32.mrf.mxu0
      %920 = vmatprep.mubr.f32.mxu0 %v470
      %921 = vmatmul.mubr.f32.gmra.mxu0 %v469
      %v922 = vpop.f32.mrf.mxu0
      %v923 = vadd.f32 %v778, %v922
      %v924 = vpop.f32.mrf.mxu0
      %925 = vmatprep.mubr.f32.mxu0 %v477
      %926 = vmatmul.mubr.f32.gmra.mxu0 %v476
      %v927 = vpop.f32.mrf.mxu0
      %v928 = vadd.f32 %v783, %v927
      %v929 = vpop.f32.mrf.mxu0
      %930 = vmatprep.mubr.f32.mxu0 %v484
      %931 = vmatmul.mubr.f32.gmra.mxu0 %v483
      %v932 = vpop.f32.mrf.mxu0
      %v933 = vadd.f32 %v788, %v932
      %v934 = vpop.f32.mrf.mxu0
      %935 = vmatprep.mubr.f32.mxu0 %v491
      %936 = vmatmul.mubr.f32.gmra.mxu0 %v490
      %v937 = vpop.f32.mrf.mxu0
      %v938 = vadd.f32 %v793, %v937
      %v939 = vpop.f32.mrf.mxu0
      %940 = vmatprep.mubr.f32.mxu0 %v498
      %941 = vmatmul.mubr.f32.gmra.mxu0 %v497
      %v942 = vpop.f32.mrf.mxu0
      %v943 = vadd.f32 %v798, %v942
      %v944 = vpop.f32.mrf.mxu0
      %945 = vdwg.mxu0
      %946 = vmatprep.subr.mxu0 0.0
      %947 = vmatpush1.msra.mxu0 %v581
      %948 = vmatprep.subr.mxu0 0.0
      %949 = vmatpush1.msra.mxu0 %v580
      %950 = vmatprep.subr.mxu0 0.0
      %951 = vmatpush1.msra.mxu0 %v579
      %952 = vmatprep.subr.mxu0 0.0
      %953 = vmatpush1.msra.mxu0 %v578
      %954 = vmatprep.subr.mxu0 0.0
      %955 = vmatpush1.msra.mxu0 %v577
      %956 = vmatprep.subr.mxu0 0.0
      %957 = vmatpush1.msra.mxu0 %v576
      %958 = vmatprep.subr.mxu0 0.0
      %959 = vmatpush1.msra.mxu0 %v575
      %960 = vmatprep.subr.mxu0 0.0
      %961 = vmatpush1.msra.mxu0 %v574
      %962 = vmatprep.subr.mxu0 0.0
      %963 = vmatpush1.msra.mxu0 %v573
      %964 = vmatprep.subr.mxu0 0.0
      %965 = vmatpush1.msra.mxu0 %v572
      %966 = vmatprep.subr.mxu0 0.0
      %967 = vmatpush1.msra.mxu0 %v571
      %968 = vmatprep.subr.mxu0 0.0
      %969 = vmatpush1.msra.mxu0 %v570
      %970 = vmatprep.subr.mxu0 0.0
      %971 = vmatpush1.msra.mxu0 %v569
      %972 = vmatprep.subr.mxu0 0.0
      %973 = vmatpush1.msra.mxu0 %v568
      %974 = vmatprep.subr.mxu0 0.0
      %975 = vmatpush1.msra.mxu0 %v567
      %976 = vmatprep.subr.mxu0 0.0
      %977 = vmatpush1.msra.mxu0 %v566
      %978 = vmatprep.subr.mxu0 0.0
      %979 = vmatpush2.msra.mxu0 %v597
      %980 = vmatprep.subr.mxu0 0.0
      %981 = vmatpush2.msra.mxu0 %v596
      %982 = vmatprep.subr.mxu0 0.0
      %983 = vmatpush2.msra.mxu0 %v595
      %984 = vmatprep.subr.mxu0 0.0
      %985 = vmatpush2.msra.mxu0 %v594
      %986 = vmatprep.subr.mxu0 0.0
      %987 = vmatpush2.msra.mxu0 %v593
      %988 = vmatprep.subr.mxu0 0.0
      %989 = vmatpush2.msra.mxu0 %v592
      %990 = vmatprep.subr.mxu0 0.0
      %991 = vmatpush2.msra.mxu0 %v591
      %992 = vmatprep.subr.mxu0 0.0
      %993 = vmatpush2.msra.mxu0 %v590
      %994 = vmatprep.subr.mxu0 0.0
      %995 = vmatpush2.msra.mxu0 %v589
      %996 = vmatprep.subr.mxu0 0.0
      %997 = vmatpush2.msra.mxu0 %v588
      %998 = vmatprep.subr.mxu0 0.0
      %999 = vmatpush2.msra.mxu0 %v587
      %1000 = vmatprep.subr.mxu0 0.0
      %1001 = vmatpush2.msra.mxu0 %v586
      %1002 = vmatprep.subr.mxu0 0.0
      %1003 = vmatpush2.msra.mxu0 %v585
      %1004 = vmatprep.subr.mxu0 0.0
      %1005 = vmatpush2.msra.mxu0 %v584
      %1006 = vmatprep.subr.mxu0 0.0
      %1007 = vmatpush2.msra.mxu0 %v583
      %1008 = vmatprep.subr.mxu0 0.0
      %1009 = vmatpush2.msra.mxu0 %v582
      %1010 = vmatprep.mubr.f32.mxu0 %v395
      %1011 = vmatmul.mubr.f32.gmra.mxu0 %v394
      %v1012 = vpop.f32.mrf.mxu0
      %v1013 = vadd.f32 %v868, %v1012
      %v1014 = vpop.f32.mrf.mxu0
      %1015 = vmatprep.mubr.f32.mxu0 %v402
      %1016 = vmatmul.mubr.f32.gmra.mxu0 %v401
      %v1017 = vpop.f32.mrf.mxu0
      %v1018 = vadd.f32 %v873, %v1017
      %v1019 = vpop.f32.mrf.mxu0
      %1020 = vmatprep.mubr.f32.mxu0 %v409
      %1021 = vmatmul.mubr.f32.gmra.mxu0 %v408
      %v1022 = vpop.f32.mrf.mxu0
      %v1023 = vadd.f32 %v878, %v1022
      %v1024 = vpop.f32.mrf.mxu0
      %1025 = vmatprep.mubr.f32.mxu0 %v416
      %1026 = vmatmul.mubr.f32.gmra.mxu0 %v415
      %v1027 = vpop.f32.mrf.mxu0
      %v1028 = vadd.f32 %v883, %v1027
      %v1029 = vpop.f32.mrf.mxu0
      %1030 = vmatprep.mubr.f32.mxu0 %v423
      %1031 = vmatmul.mubr.f32.gmra.mxu0 %v422
      %v1032 = vpop.f32.mrf.mxu0
      %v1033 = vadd.f32 %v888, %v1032
      %v1034 = vpop.f32.mrf.mxu0
      %1035 = vmatprep.mubr.f32.mxu0 %v430
      %1036 = vmatmul.mubr.f32.gmra.mxu0 %v429
      %v1037 = vpop.f32.mrf.mxu0
      %v1038 = vadd.f32 %v893, %v1037
      %v1039 = vpop.f32.mrf.mxu0
      %1040 = vmatprep.mubr.f32.mxu0 %v437
      %1041 = vmatmul.mubr.f32.gmra.mxu0 %v436
      %v1042 = vpop.f32.mrf.mxu0
      %v1043 = vadd.f32 %v898, %v1042
      %v1044 = vpop.f32.mrf.mxu0
      %1045 = vmatprep.mubr.f32.mxu0 %v444
      %1046 = vmatmul.mubr.f32.gmra.mxu0 %v443
      %v1047 = vpop.f32.mrf.mxu0
      %v1048 = vadd.f32 %v903, %v1047
      %v1049 = vpop.f32.mrf.mxu0
      %1050 = vmatprep.mubr.f32.mxu0 %v451
      %1051 = vmatmul.mubr.f32.gmra.mxu0 %v450
      %v1052 = vpop.f32.mrf.mxu0
      %v1053 = vadd.f32 %v908, %v1052
      %v1054 = vpop.f32.mrf.mxu0
      %1055 = vmatprep.mubr.f32.mxu0 %v458
      %1056 = vmatmul.mubr.f32.gmra.mxu0 %v457
      %v1057 = vpop.f32.mrf.mxu0
      %v1058 = vadd.f32 %v913, %v1057
      %v1059 = vpop.f32.mrf.mxu0
      %1060 = vmatprep.mubr.f32.mxu0 %v465
      %1061 = vmatmul.mubr.f32.gmra.mxu0 %v464
      %v1062 = vpop.f32.mrf.mxu0
      %v1063 = vadd.f32 %v918, %v1062
      %v1064 = vpop.f32.mrf.mxu0
      %1065 = vmatprep.mubr.f32.mxu0 %v472
      %1066 = vmatmul.mubr.f32.gmra.mxu0 %v471
      %v1067 = vpop.f32.mrf.mxu0
      %v1068 = vadd.f32 %v923, %v1067
      %v1069 = vpop.f32.mrf.mxu0
      %1070 = vmatprep.mubr.f32.mxu0 %v479
      %1071 = vmatmul.mubr.f32.gmra.mxu0 %v478
      %v1072 = vpop.f32.mrf.mxu0
      %v1073 = vadd.f32 %v928, %v1072
      %v1074 = vpop.f32.mrf.mxu0
      %1075 = vmatprep.mubr.f32.mxu0 %v486
      %1076 = vmatmul.mubr.f32.gmra.mxu0 %v485
      %v1077 = vpop.f32.mrf.mxu0
      %v1078 = vadd.f32 %v933, %v1077
      %v1079 = vpop.f32.mrf.mxu0
      %1080 = vmatprep.mubr.f32.mxu0 %v493
      %1081 = vmatmul.mubr.f32.gmra.mxu0 %v492
      %v1082 = vpop.f32.mrf.mxu0
      %v1083 = vadd.f32 %v938, %v1082
      %v1084 = vpop.f32.mrf.mxu0
      %1085 = vmatprep.mubr.f32.mxu0 %v500
      %1086 = vmatmul.mubr.f32.gmra.mxu0 %v499
      %v1087 = vpop.f32.mrf.mxu0
      %v1088 = vadd.f32 %v943, %v1087
      %v1089 = vpop.f32.mrf.mxu0
      %1090 = vdwg.mxu0
      %1091 = vmatprep.subr.mxu0 0.0
      %1092 = vmatpush1.msra.mxu0 0.0
      %1093 = vmatprep.subr.mxu0 0.0
      %1094 = vmatpush1.msra.mxu0 0.0
      %1095 = vmatprep.subr.mxu0 0.0
      %1096 = vmatpush1.msra.mxu0 0.0
      %1097 = vmatprep.subr.mxu0 0.0
      %1098 = vmatpush1.msra.mxu0 0.0
      %1099 = vmatprep.subr.mxu0 0.0
      %1100 = vmatpush1.msra.mxu0 0.0
      %1101 = vmatprep.subr.mxu0 0.0
      %1102 = vmatpush1.msra.mxu0 0.0
      %1103 = vmatprep.subr.mxu0 0.0
      %1104 = vmatpush1.msra.mxu0 0.0
      %1105 = vmatprep.subr.mxu0 0.0
      %1106 = vmatpush1.msra.mxu0 0.0
      %1107 = vmatprep.subr.mxu0 0.0
      %1108 = vmatpush1.msra.mxu0 0.0
      %1109 = vmatprep.subr.mxu0 0.0
      %1110 = vmatpush1.msra.mxu0 0.0
      %1111 = vmatprep.subr.mxu0 0.0
      %1112 = vmatpush1.msra.mxu0 0.0
      %1113 = vmatprep.subr.mxu0 0.0
      %1114 = vmatpush1.msra.mxu0 0.0
      %1115 = vmatprep.subr.mxu0 0.0
      %1116 = vmatpush1.msra.mxu0 0.0
      %1117 = vmatprep.subr.mxu0 0.0
      %1118 = vmatpush1.msra.mxu0 0.0
      %1119 = vmatprep.subr.mxu0 0.0
      %1120 = vmatpush1.msra.mxu0 %v599
      %1121 = vmatprep.subr.mxu0 0.0
      %1122 = vmatpush1.msra.mxu0 %v598
      %1123 = vmatprep.subr.mxu0 0.0
      %1124 = vmatpush2.msra.mxu0 0.0
      %1125 = vmatprep.subr.mxu0 0.0
      %1126 = vmatpush2.msra.mxu0 0.0
      %1127 = vmatprep.subr.mxu0 0.0
      %1128 = vmatpush2.msra.mxu0 0.0
      %1129 = vmatprep.subr.mxu0 0.0
      %1130 = vmatpush2.msra.mxu0 0.0
      %1131 = vmatprep.subr.mxu0 0.0
      %1132 = vmatpush2.msra.mxu0 0.0
      %1133 = vmatprep.subr.mxu0 0.0
      %1134 = vmatpush2.msra.mxu0 0.0
      %1135 = vmatprep.subr.mxu0 0.0
      %1136 = vmatpush2.msra.mxu0 0.0
      %1137 = vmatprep.subr.mxu0 0.0
      %1138 = vmatpush2.msra.mxu0 0.0
      %1139 = vmatprep.subr.mxu0 0.0
      %1140 = vmatpush2.msra.mxu0 0.0
      %1141 = vmatprep.subr.mxu0 0.0
      %1142 = vmatpush2.msra.mxu0 0.0
      %1143 = vmatprep.subr.mxu0 0.0
      %1144 = vmatpush2.msra.mxu0 0.0
      %1145 = vmatprep.subr.mxu0 0.0
      %1146 = vmatpush2.msra.mxu0 0.0
      %1147 = vmatprep.subr.mxu0 0.0
      %1148 = vmatpush2.msra.mxu0 0.0
      %1149 = vmatprep.subr.mxu0 0.0
      %1150 = vmatpush2.msra.mxu0 0.0
      %1151 = vmatprep.subr.mxu0 0.0
      %1152 = vmatpush2.msra.mxu0 0.0
      %1153 = vmatprep.subr.mxu0 0.0
      %1154 = vmatpush2.msra.mxu0 0.0
      %1155 = vmatprep.mubr.f32.mxu0 0.0
      %1156 = vmatmul.mubr.f32.gmra.mxu0 %v609
      %v1157 = vpop.f32.mrf.mxu0
      %v1158 = vadd.f32 %v1013, %v1157
      %v1159 = vpop.f32.mrf.mxu0
      %1160 = vmatprep.mubr.f32.mxu0 0.0
      %1161 = vmatmul.mubr.f32.gmra.mxu0 %v612
      %v1162 = vpop.f32.mrf.mxu0
      %v1163 = vadd.f32 %v1018, %v1162
      %v1164 = vpop.f32.mrf.mxu0
      %1165 = vmatprep.mubr.f32.mxu0 0.0
      %1166 = vmatmul.mubr.f32.gmra.mxu0 %v615
      %v1167 = vpop.f32.mrf.mxu0
      %v1168 = vadd.f32 %v1023, %v1167
      %v1169 = vpop.f32.mrf.mxu0
      %1170 = vmatprep.mubr.f32.mxu0 0.0
      %1171 = vmatmul.mubr.f32.gmra.mxu0 %v618
      %v1172 = vpop.f32.mrf.mxu0
      %v1173 = vadd.f32 %v1028, %v1172
      %v1174 = vpop.f32.mrf.mxu0
      %1175 = vmatprep.mubr.f32.mxu0 0.0
      %1176 = vmatmul.mubr.f32.gmra.mxu0 %v621
      %v1177 = vpop.f32.mrf.mxu0
      %v1178 = vadd.f32 %v1033, %v1177
      %v1179 = vpop.f32.mrf.mxu0
      %1180 = vmatprep.mubr.f32.mxu0 0.0
      %1181 = vmatmul.mubr.f32.gmra.mxu0 %v624
      %v1182 = vpop.f32.mrf.mxu0
      %v1183 = vadd.f32 %v1038, %v1182
      %v1184 = vpop.f32.mrf.mxu0
      %1185 = vmatprep.mubr.f32.mxu0 0.0
      %1186 = vmatmul.mubr.f32.gmra.mxu0 %v627
      %v1187 = vpop.f32.mrf.mxu0
      %v1188 = vadd.f32 %v1043, %v1187
      %v1189 = vpop.f32.mrf.mxu0
      %1190 = vmatprep.mubr.f32.mxu0 0.0
      %1191 = vmatmul.mubr.f32.gmra.mxu0 %v630
      %v1192 = vpop.f32.mrf.mxu0
      %v1193 = vadd.f32 %v1048, %v1192
      %v1194 = vpop.f32.mrf.mxu0
      %1195 = vmatprep.mubr.f32.mxu0 0.0
      %1196 = vmatmul.mubr.f32.gmra.mxu0 %v633
      %v1197 = vpop.f32.mrf.mxu0
      %v1198 = vadd.f32 %v1053, %v1197
      %v1199 = vpop.f32.mrf.mxu0
      %1200 = vmatprep.mubr.f32.mxu0 0.0
      %1201 = vmatmul.mubr.f32.gmra.mxu0 %v636
      %v1202 = vpop.f32.mrf.mxu0
      %v1203 = vadd.f32 %v1058, %v1202
      %v1204 = vpop.f32.mrf.mxu0
      %1205 = vmatprep.mubr.f32.mxu0 0.0
      %1206 = vmatmul.mubr.f32.gmra.mxu0 %v639
      %v1207 = vpop.f32.mrf.mxu0
      %v1208 = vadd.f32 %v1063, %v1207
      %v1209 = vpop.f32.mrf.mxu0
      %1210 = vmatprep.mubr.f32.mxu0 0.0
      %1211 = vmatmul.mubr.f32.gmra.mxu0 %v642
      %v1212 = vpop.f32.mrf.mxu0
      %v1213 = vadd.f32 %v1068, %v1212
      %v1214 = vpop.f32.mrf.mxu0
      %1215 = vmatprep.mubr.f32.mxu0 0.0
      %1216 = vmatmul.mubr.f32.gmra.mxu0 %v645
      %v1217 = vpop.f32.mrf.mxu0
      %v1218 = vadd.f32 %v1073, %v1217
      %v1219 = vpop.f32.mrf.mxu0
      %1220 = vmatprep.mubr.f32.mxu0 0.0
      %1221 = vmatmul.mubr.f32.gmra.mxu0 %v648
      %v1222 = vpop.f32.mrf.mxu0
      %v1223 = vadd.f32 %v1078, %v1222
      %v1224 = vpop.f32.mrf.mxu0
      %1225 = vmatprep.mubr.f32.mxu0 0.0
      %1226 = vmatmul.mubr.f32.gmra.mxu0 %v651
      %v1227 = vpop.f32.mrf.mxu0
      %v1228 = vadd.f32 %v1083, %v1227
      %v1229 = vpop.f32.mrf.mxu0
      %1230 = vmatprep.mubr.f32.mxu0 0.0
      %1231 = vmatmul.mubr.f32.gmra.mxu0 %v654
      %v1232 = vpop.f32.mrf.mxu0
      %v1233 = vadd.f32 %v1088, %v1232
      %v1234 = vpop.f32.mrf.mxu0
      %1235 = vdwg.mxu0
      %vm1236 = vcmp.ge.f32.partialorder %v1158, 0.0
      %vm1237 = vcmp.ge.f32.partialorder %v1163, 0.0
      %vm1238 = vcmp.ge.f32.partialorder %v1168, 0.0
      %vm1239 = vcmp.ge.f32.partialorder %v1173, 0.0
      %vm1240 = vcmp.ge.f32.partialorder %v1178, 0.0
      %vm1241 = vcmp.ge.f32.partialorder %v1183, 0.0
      %vm1242 = vcmp.ge.f32.partialorder %v1188, 0.0
      %vm1243 = vcmp.ge.f32.partialorder %v1193, 0.0
      %vm1244 = vcmp.ge.f32.partialorder %v1198, 0.0
      %vm1245 = vcmp.ge.f32.partialorder %v1203, 0.0
      %vm1246 = vcmp.ge.f32.partialorder %v1208, 0.0
      %vm1247 = vcmp.ge.f32.partialorder %v1213, 0.0
      %vm1248 = vcmp.ge.f32.partialorder %v1218, 0.0
      %vm1249 = vcmp.ge.f32.partialorder %v1223, 0.0
      %vm1250 = vcmp.ge.f32.partialorder %v1228, 0.0
      %vm1251 = vcmp.ge.f32.partialorder %v1233, 0.0
      %v1252 = vmul.f32 %v1158, 0.1
      %v1253 = vmul.f32 %v1163, 0.1
      %v1254 = vmul.f32 %v1168, 0.1
      %v1255 = vmul.f32 %v1173, 0.1
      %v1256 = vmul.f32 %v1178, 0.1
      %v1257 = vmul.f32 %v1183, 0.1
      %v1258 = vmul.f32 %v1188, 0.1
      %v1259 = vmul.f32 %v1193, 0.1
      %v1260 = vmul.f32 %v1198, 0.1
      %v1261 = vmul.f32 %v1203, 0.1
      %v1262 = vmul.f32 %v1208, 0.1
      %v1263 = vmul.f32 %v1213, 0.1
      %v1264 = vmul.f32 %v1218, 0.1
      %v1265 = vmul.f32 %v1223, 0.1
      %v1266 = vmul.f32 %v1228, 0.1
      %v1267 = vmul.f32 %v1233, 0.1
      %v1268 = vsel %vm1236, %v1158, %v1252
      %v1269 = vsel %vm1237, %v1163, %v1253
      %v1270 = vsel %vm1238, %v1168, %v1254
      %v1271 = vsel %vm1239, %v1173, %v1255
      %v1272 = vsel %vm1240, %v1178, %v1256
      %v1273 = vsel %vm1241, %v1183, %v1257
      %v1274 = vsel %vm1242, %v1188, %v1258
      %v1275 = vsel %vm1243, %v1193, %v1259
      %v1276 = vsel %vm1244, %v1198, %v1260
      %v1277 = vsel %vm1245, %v1203, %v1261
      %v1278 = vsel %vm1246, %v1208, %v1262
      %v1279 = vsel %vm1247, %v1213, %v1263
      %v1280 = vsel %vm1248, %v1218, %v1264
      %v1281 = vsel %vm1249, %v1223, %v1265
      %v1282 = vsel %vm1250, %v1228, %v1266
      %v1283 = vsel %vm1251, %v1233, %v1267
      %v1284 = vld [vmem:[%s3] sm:$0xff]
      %v1285 = vld [vmem:[%s3 + $0x8] sm:$0xff]
      %v1286 = vld [vmem:[%s3 + $0x10] sm:$0xff]
      %v1287 = vld [vmem:[%s3 + $0x18] sm:$0xff]
      %v1288 = vld [vmem:[%s3 + $0x20] sm:$0xff]
      %v1289 = vld [vmem:[%s3 + $0x28] sm:$0xff]
      %v1290 = vld [vmem:[%s3 + $0x30] sm:$0xff]
      %v1291 = vld [vmem:[%s3 + $0x38] sm:$0xff]
      %v1292 = vld [vmem:[%s4] sm:$0xff]
      %v1293 = vld [vmem:[%s4 + $0x8] sm:$0xff]
      %v1294 = vld [vmem:[%s4 + $0x10] sm:$0xff]
      %v1295 = vld [vmem:[%s4 + $0x18] sm:$0xff]
      %v1296 = vld [vmem:[%s4 + $0x20] sm:$0xff]
      %v1297 = vld [vmem:[%s4 + $0x28] sm:$0xff]
      %v1298 = vld [vmem:[%s4 + $0x30] sm:$0xff]
      %v1299 = vld [vmem:[%s4 + $0x38] sm:$0xff]
      %1301 = vset.pattern.permute.xlu0 0
      %1302 = vperm.xlu0 %1301, %v1292
      %v1303 = vpop.permute.xlu0 %1302
      %1306 = vset.pattern.permute.xlu0 0
      %1307 = vperm.xlu0 %1306, %v1293
      %v1308 = vpop.permute.xlu0 %1307
      %1311 = vset.pattern.permute.xlu0 0
      %1312 = vperm.xlu0 %1311, %v1294
      %v1313 = vpop.permute.xlu0 %1312
      %1316 = vset.pattern.permute.xlu0 0
      %1317 = vperm.xlu0 %1316, %v1295
      %v1318 = vpop.permute.xlu0 %1317
      %1321 = vset.pattern.permute.xlu0 0
      %1322 = vperm.xlu0 %1321, %v1296
      %v1323 = vpop.permute.xlu0 %1322
      %1326 = vset.pattern.permute.xlu0 0
      %1327 = vperm.xlu0 %1326, %v1297
      %v1328 = vpop.permute.xlu0 %1327
      %1331 = vset.pattern.permute.xlu0 0
      %1332 = vperm.xlu0 %1331, %v1298
      %v1333 = vpop.permute.xlu0 %1332
      %1336 = vset.pattern.permute.xlu0 0
      %1337 = vperm.xlu0 %1336, %v1299
      %v1338 = vpop.permute.xlu0 %1337
      %1340 = vmatprep.subr.mxu0 0.0
      %1341 = vmatpush1.xpose.msra.mxu0 %v1283
      %1342 = vmatprep.subr.mxu0 0.0
      %1343 = vmatpush1.xpose.msra.mxu0 %v1282
      %1344 = vmatprep.subr.mxu0 0.0
      %1345 = vmatpush1.xpose.msra.mxu0 %v1281
      %1346 = vmatprep.subr.mxu0 0.0
      %1347 = vmatpush1.xpose.msra.mxu0 %v1280
      %1348 = vmatprep.subr.mxu0 0.0
      %1349 = vmatpush1.xpose.msra.mxu0 %v1279
      %1350 = vmatprep.subr.mxu0 0.0
      %1351 = vmatpush1.xpose.msra.mxu0 %v1278
      %1352 = vmatprep.subr.mxu0 0.0
      %1353 = vmatpush1.xpose.msra.mxu0 %v1277
      %1354 = vmatprep.subr.mxu0 0.0
      %1355 = vmatpush1.xpose.msra.mxu0 %v1276
      %1356 = vmatprep.subr.mxu0 0.0
      %1357 = vmatpush1.xpose.msra.mxu0 %v1275
      %1358 = vmatprep.subr.mxu0 0.0
      %1359 = vmatpush1.xpose.msra.mxu0 %v1274
      %1360 = vmatprep.subr.mxu0 0.0
      %1361 = vmatpush1.xpose.msra.mxu0 %v1273
      %1362 = vmatprep.subr.mxu0 0.0
      %1363 = vmatpush1.xpose.msra.mxu0 %v1272
      %1364 = vmatprep.subr.mxu0 0.0
      %1365 = vmatpush1.xpose.msra.mxu0 %v1271
      %1366 = vmatprep.subr.mxu0 0.0
      %1367 = vmatpush1.xpose.msra.mxu0 %v1270
      %1368 = vmatprep.subr.mxu0 0.0
      %1369 = vmatpush1.xpose.msra.mxu0 %v1269
      %1370 = vmatprep.subr.mxu0 0.0
      %1371 = vmatpush1.xpose.msra.mxu0 %v1268
      %1372 = vmatprep.subr.mxu0 0.0
      %1373 = vmatpush2.xpose.msra.mxu0 0.0
      %1374 = vmatprep.subr.mxu0 0.0
      %1375 = vmatpush2.xpose.msra.mxu0 0.0
      %1376 = vmatprep.subr.mxu0 0.0
      %1377 = vmatpush2.xpose.msra.mxu0 0.0
      %1378 = vmatprep.subr.mxu0 0.0
      %1379 = vmatpush2.xpose.msra.mxu0 0.0
      %1380 = vmatprep.subr.mxu0 0.0
      %1381 = vmatpush2.xpose.msra.mxu0 0.0
      %1382 = vmatprep.subr.mxu0 0.0
      %1383 = vmatpush2.xpose.msra.mxu0 0.0
      %1384 = vmatprep.subr.mxu0 0.0
      %1385 = vmatpush2.xpose.msra.mxu0 0.0
      %1386 = vmatprep.subr.mxu0 0.0
      %1387 = vmatpush2.xpose.msra.mxu0 0.0
      %1388 = vmatprep.subr.mxu0 0.0
      %1389 = vmatpush2.xpose.msra.mxu0 0.0
      %1390 = vmatprep.subr.mxu0 0.0
      %1391 = vmatpush2.xpose.msra.mxu0 0.0
      %1392 = vmatprep.subr.mxu0 0.0
      %1393 = vmatpush2.xpose.msra.mxu0 0.0
      %1394 = vmatprep.subr.mxu0 0.0
      %1395 = vmatpush2.xpose.msra.mxu0 0.0
      %1396 = vmatprep.subr.mxu0 0.0
      %1397 = vmatpush2.xpose.msra.mxu0 0.0
      %1398 = vmatprep.subr.mxu0 0.0
      %1399 = vmatpush2.xpose.msra.mxu0 0.0
      %1400 = vmatprep.subr.mxu0 0.0
      %1401 = vmatpush2.xpose.msra.mxu0 0.0
      %1402 = vmatprep.subr.mxu0 0.0
      %1403 = vmatpush2.xpose.msra.mxu0 0.0
      %1404 = vmatprep.mubr.f32.mxu0 0.0
      %1405 = vmatmul.mubr.f32.gmra.mxu0 %v1284
      %v1406 = vpop.f32.mrf.mxu0
      %v1407 = vadd.f32 %v1303, %v1406
      %v1408 = vpop.f32.mrf.mxu0
      %1409 = vmatprep.mubr.f32.mxu0 0.0
      %1410 = vmatmul.mubr.f32.gmra.mxu0 %v1285
      %v1411 = vpop.f32.mrf.mxu0
      %v1412 = vadd.f32 %v1308, %v1411
      %v1413 = vpop.f32.mrf.mxu0
      %1414 = vmatprep.mubr.f32.mxu0 0.0
      %1415 = vmatmul.mubr.f32.gmra.mxu0 %v1286
      %v1416 = vpop.f32.mrf.mxu0
      %v1417 = vadd.f32 %v1313, %v1416
      %v1418 = vpop.f32.mrf.mxu0
      %1419 = vmatprep.mubr.f32.mxu0 0.0
      %1420 = vmatmul.mubr.f32.gmra.mxu0 %v1287
      %v1421 = vpop.f32.mrf.mxu0
      %v1422 = vadd.f32 %v1318, %v1421
      %v1423 = vpop.f32.mrf.mxu0
      %1424 = vmatprep.mubr.f32.mxu0 0.0
      %1425 = vmatmul.mubr.f32.gmra.mxu0 %v1288
      %v1426 = vpop.f32.mrf.mxu0
      %v1427 = vadd.f32 %v1323, %v1426
      %v1428 = vpop.f32.mrf.mxu0
      %1429 = vmatprep.mubr.f32.mxu0 0.0
      %1430 = vmatmul.mubr.f32.gmra.mxu0 %v1289
      %v1431 = vpop.f32.mrf.mxu0
      %v1432 = vadd.f32 %v1328, %v1431
      %v1433 = vpop.f32.mrf.mxu0
      %1434 = vmatprep.mubr.f32.mxu0 0.0
      %1435 = vmatmul.mubr.f32.gmra.mxu0 %v1290
      %v1436 = vpop.f32.mrf.mxu0
      %v1437 = vadd.f32 %v1333, %v1436
      %v1438 = vpop.f32.mrf.mxu0
      %1439 = vmatprep.mubr.f32.mxu0 0.0
      %1440 = vmatmul.mubr.f32.gmra.mxu0 %v1291
      %v1441 = vpop.f32.mrf.mxu0
      %v1442 = vadd.f32 %v1338, %v1441
      %v1443 = vpop.f32.mrf.mxu0
      %1444 = vdwg.mxu0
      %vm1445 = vcmp.ge.f32.partialorder %v1407, 0.0
      %vm1446 = vcmp.ge.f32.partialorder %v1412, 0.0
      %vm1447 = vcmp.ge.f32.partialorder %v1417, 0.0
      %vm1448 = vcmp.ge.f32.partialorder %v1422, 0.0
      %vm1449 = vcmp.ge.f32.partialorder %v1427, 0.0
      %vm1450 = vcmp.ge.f32.partialorder %v1432, 0.0
      %vm1451 = vcmp.ge.f32.partialorder %v1437, 0.0
      %vm1452 = vcmp.ge.f32.partialorder %v1442, 0.0
      %v1453 = vmul.f32 %v1407, 0.1
      %v1454 = vmul.f32 %v1412, 0.1
      %v1455 = vmul.f32 %v1417, 0.1
      %v1456 = vmul.f32 %v1422, 0.1
      %v1457 = vmul.f32 %v1427, 0.1
      %v1458 = vmul.f32 %v1432, 0.1
      %v1459 = vmul.f32 %v1437, 0.1
      %v1460 = vmul.f32 %v1442, 0.1
      %v1461 = vsel %vm1445, %v1407, %v1453
      %v1462 = vsel %vm1446, %v1412, %v1454
      %v1463 = vsel %vm1447, %v1417, %v1455
      %v1464 = vsel %vm1448, %v1422, %v1456
      %v1465 = vsel %vm1449, %v1427, %v1457
      %v1466 = vsel %vm1450, %v1432, %v1458
      %v1467 = vsel %vm1451, %v1437, %v1459
      %v1468 = vsel %vm1452, %v1442, %v1460
      %v1469 = vld [vmem:[%s5] sm:$0xff]
      %v1470 = vld [vmem:[%s5 + $0x8] sm:$0xff]
      %v1471 = vld [vmem:[%s6] sm:$0xff]
      %v1472 = vld [vmem:[%s6 + $0x8] sm:$0xff]
      %1474 = vset.pattern.permute.xlu0 0
      %1475 = vperm.xlu0 %1474, %v1471
      %v1476 = vpop.permute.xlu0 %1475
      %1479 = vset.pattern.permute.xlu0 0
      %1480 = vperm.xlu0 %1479, %v1472
      %v1481 = vpop.permute.xlu0 %1480
      %vm1483 = vcmask 523264
      %v1485 = vsel %vm1483, %v1469, 0
      %v1488 = vsel %vm1483, %v1470, 0
      %1490 = vmatprep.subr.mxu0 0.0
      %1491 = vmatpush1.msra.mxu0 0.0
      %1492 = vmatprep.subr.mxu0 0.0
      %1493 = vmatpush1.msra.mxu0 0.0
      %1494 = vmatprep.subr.mxu0 0.0
      %1495 = vmatpush1.msra.mxu0 0.0
      %1496 = vmatprep.subr.mxu0 0.0
      %1497 = vmatpush1.msra.mxu0 0.0
      %1498 = vmatprep.subr.mxu0 0.0
      %1499 = vmatpush1.msra.mxu0 0.0
      %1500 = vmatprep.subr.mxu0 0.0
      %1501 = vmatpush1.msra.mxu0 0.0
      %1502 = vmatprep.subr.mxu0 0.0
      %1503 = vmatpush1.msra.mxu0 0.0
      %1504 = vmatprep.subr.mxu0 0.0
      %1505 = vmatpush1.msra.mxu0 0.0
      %1506 = vmatprep.subr.mxu0 0.0
      %1507 = vmatpush1.msra.mxu0 %v1468
      %1508 = vmatprep.subr.mxu0 0.0
      %1509 = vmatpush1.msra.mxu0 %v1467
      %1510 = vmatprep.subr.mxu0 0.0
      %1511 = vmatpush1.msra.mxu0 %v1466
      %1512 = vmatprep.subr.mxu0 0.0
      %1513 = vmatpush1.msra.mxu0 %v1465
      %1514 = vmatprep.subr.mxu0 0.0
      %1515 = vmatpush1.msra.mxu0 %v1464
      %1516 = vmatprep.subr.mxu0 0.0
      %1517 = vmatpush1.msra.mxu0 %v1463
      %1518 = vmatprep.subr.mxu0 0.0
      %1519 = vmatpush1.msra.mxu0 %v1462
      %1520 = vmatprep.subr.mxu0 0.0
      %1521 = vmatpush1.msra.mxu0 %v1461
      %1522 = vmatprep.subr.mxu0 0.0
      %1523 = vmatpush2.msra.mxu0 0.0
      %1524 = vmatprep.subr.mxu0 0.0
      %1525 = vmatpush2.msra.mxu0 0.0
      %1526 = vmatprep.subr.mxu0 0.0
      %1527 = vmatpush2.msra.mxu0 0.0
      %1528 = vmatprep.subr.mxu0 0.0
      %1529 = vmatpush2.msra.mxu0 0.0
      %1530 = vmatprep.subr.mxu0 0.0
      %1531 = vmatpush2.msra.mxu0 0.0
      %1532 = vmatprep.subr.mxu0 0.0
      %1533 = vmatpush2.msra.mxu0 0.0
      %1534 = vmatprep.subr.mxu0 0.0
      %1535 = vmatpush2.msra.mxu0 0.0
      %1536 = vmatprep.subr.mxu0 0.0
      %1537 = vmatpush2.msra.mxu0 0.0
      %1538 = vmatprep.subr.mxu0 0.0
      %1539 = vmatpush2.msra.mxu0 0.0
      %1540 = vmatprep.subr.mxu0 0.0
      %1541 = vmatpush2.msra.mxu0 0.0
      %1542 = vmatprep.subr.mxu0 0.0
      %1543 = vmatpush2.msra.mxu0 0.0
      %1544 = vmatprep.subr.mxu0 0.0
      %1545 = vmatpush2.msra.mxu0 0.0
      %1546 = vmatprep.subr.mxu0 0.0
      %1547 = vmatpush2.msra.mxu0 0.0
      %1548 = vmatprep.subr.mxu0 0.0
      %1549 = vmatpush2.msra.mxu0 0.0
      %1550 = vmatprep.subr.mxu0 0.0
      %1551 = vmatpush2.msra.mxu0 0.0
      %1552 = vmatprep.subr.mxu0 0.0
      %1553 = vmatpush2.msra.mxu0 0.0
      %1554 = vmatprep.mubr.f32.mxu0 0.0
      %1555 = vmatmul.mubr.f32.gmra.mxu0 %v1485
      %v1556 = vpop.f32.mrf.mxu0
      %v1557 = vadd.f32 %v1476, %v1556
      %v1558 = vpop.f32.mrf.mxu0
      %1559 = vmatprep.mubr.f32.mxu0 0.0
      %1560 = vmatmul.mubr.f32.gmra.mxu0 %v1488
      %v1561 = vpop.f32.mrf.mxu0
      %v1562 = vadd.f32 %v1481, %v1561
      %v1563 = vpop.f32.mrf.mxu0
      %1564 = vdwg.mxu0
      %vm1565 = vcmp.ge.f32.partialorder %v1557, 0.0
      %vm1566 = vcmp.ge.f32.partialorder %v1562, 0.0
      %v1567 = vmul.f32 %v1557, 0.1
      %v1568 = vmul.f32 %v1562, 0.1
      %v1569 = vsel %vm1565, %v1557, %v1567
      %v1570 = vsel %vm1566, %v1562, %v1568
      %v1571 = vld [vmem:[%s7] sm:$0xff]
      %v1572 = vld [vmem:[%s8] sm:$0xff]
      %1574 = vset.pattern.permute.xlu0 0
      %1575 = vperm.xlu0 %1574, %v1572
      %v1576 = vpop.permute.xlu0 %1575
      %v1579 = vsel %vm607, %v1571, 0
      %1581 = vmatprep.subr.mxu0 0.0
      %1582 = vmatpush1.msra.mxu0 0.0
      %1583 = vmatprep.subr.mxu0 0.0
      %1584 = vmatpush1.msra.mxu0 0.0
      %1585 = vmatprep.subr.mxu0 0.0
      %1586 = vmatpush1.msra.mxu0 0.0
      %1587 = vmatprep.subr.mxu0 0.0
      %1588 = vmatpush1.msra.mxu0 0.0
      %1589 = vmatprep.subr.mxu0 0.0
      %1590 = vmatpush1.msra.mxu0 0.0
      %1591 = vmatprep.subr.mxu0 0.0
      %1592 = vmatpush1.msra.mxu0 0.0
      %1593 = vmatprep.subr.mxu0 0.0
      %1594 = vmatpush1.msra.mxu0 0.0
      %1595 = vmatprep.subr.mxu0 0.0
      %1596 = vmatpush1.msra.mxu0 0.0
      %1597 = vmatprep.subr.mxu0 0.0
      %1598 = vmatpush1.msra.mxu0 0.0
      %1599 = vmatprep.subr.mxu0 0.0
      %1600 = vmatpush1.msra.mxu0 0.0
      %1601 = vmatprep.subr.mxu0 0.0
      %1602 = vmatpush1.msra.mxu0 0.0
      %1603 = vmatprep.subr.mxu0 0.0
      %1604 = vmatpush1.msra.mxu0 0.0
      %1605 = vmatprep.subr.mxu0 0.0
      %1606 = vmatpush1.msra.mxu0 0.0
      %1607 = vmatprep.subr.mxu0 0.0
      %1608 = vmatpush1.msra.mxu0 0.0
      %1609 = vmatprep.subr.mxu0 0.0
      %1610 = vmatpush1.msra.mxu0 %v1570
      %1611 = vmatprep.subr.mxu0 0.0
      %1612 = vmatpush1.msra.mxu0 %v1569
      %1613 = vmatprep.subr.mxu0 0.0
      %1614 = vmatpush2.msra.mxu0 0.0
      %1615 = vmatprep.subr.mxu0 0.0
      %1616 = vmatpush2.msra.mxu0 0.0
      %1617 = vmatprep.subr.mxu0 0.0
      %1618 = vmatpush2.msra.mxu0 0.0
      %1619 = vmatprep.subr.mxu0 0.0
      %1620 = vmatpush2.msra.mxu0 0.0
      %1621 = vmatprep.subr.mxu0 0.0
      %1622 = vmatpush2.msra.mxu0 0.0
      %1623 = vmatprep.subr.mxu0 0.0
      %1624 = vmatpush2.msra.mxu0 0.0
      %1625 = vmatprep.subr.mxu0 0.0
      %1626 = vmatpush2.msra.mxu0 0.0
      %1627 = vmatprep.subr.mxu0 0.0
      %1628 = vmatpush2.msra.mxu0 0.0
      %1629 = vmatprep.subr.mxu0 0.0
      %1630 = vmatpush2.msra.mxu0 0.0
      %1631 = vmatprep.subr.mxu0 0.0
      %1632 = vmatpush2.msra.mxu0 0.0
      %1633 = vmatprep.subr.mxu0 0.0
      %1634 = vmatpush2.msra.mxu0 0.0
      %1635 = vmatprep.subr.mxu0 0.0
      %1636 = vmatpush2.msra.mxu0 0.0
      %1637 = vmatprep.subr.mxu0 0.0
      %1638 = vmatpush2.msra.mxu0 0.0
      %1639 = vmatprep.subr.mxu0 0.0
      %1640 = vmatpush2.msra.mxu0 0.0
      %1641 = vmatprep.subr.mxu0 0.0
      %1642 = vmatpush2.msra.mxu0 0.0
      %1643 = vmatprep.subr.mxu0 0.0
      %1644 = vmatpush2.msra.mxu0 0.0
      %1645 = vmatprep.mubr.f32.mxu0 0.0
      %1646 = vmatmul.mubr.f32.gmra.mxu0 %v1579
      %v1647 = vpop.f32.mrf.mxu0
      %v1648 = vadd.f32 %v1576, %v1647
      %v1649 = vpop.f32.mrf.mxu0
      %1650 = vdwg.mxu0
      %vm1651 = vcmp.ge.f32.partialorder %v1648, 0.0
      %v1652 = vmul.f32 %v1648, 0.1
      %v1653 = vsel %vm1651, %v1648, %v1652
      %v1654 = vld [vmem:[%s9] sm:$0xff]
      %1656 = vset.pattern.permute.xlu0 0
      %1657 = vperm.xlu0 %1656, %v1654
      %v1658 = vpop.permute.xlu0 %1657
      %v1660 = vmul.f32 %v1653, %v1658
      %v1661 = vrot.slane %v1660, 4
      %v1662 = vadd.f32 %v1660, %v1661
      %v1663 = vrot.slane %v1662, 2
      %v1664 = vadd.f32 %v1662, %v1663
      %v1665 = vrot.slane %v1664, 1
      %v1666 = vadd.f32 %v1664, %v1665
      %v1667 = vld [vmem:[#allocation2] sm:$0x1]
      %1669 = vset.pattern.permute.xlu0 0
      %1670 = vperm.xlu0 %1669, %v1667
      %v1671 = vpop.permute.xlu0 %1670
      %v1673 = vlaneseq
      %v1674 = vshrl.u32 %v1673, 7
      %v1675 = vsub.s32 0, %v1674
      %v1676 = vrot.slane %v1671, %v1675
      %v1677 = vadd.f32 %v1666, %v1676
      %v1678 = vsub.f32 0.0, %v1677
      %v1679 = vmul.f32 %v1678, 1.442695
      %v1680 = vpow.pop %v1679
      %v1681 = vadd.f32 %v1680, 1.0
      %v1682 = vrcp.pop %v1681
      %1683 = vst [vmem:[%s389] sm:$0x1] %v1682
      %p1684 = scmp.lt.s32.totalorder %s24, 2
      %s1685 = scalar_select %p1684, %s24, 2
      %s1686 = scalar_lea.vmem %s11, %s1685
      // Predicated region
      $region65: #{discriminator_forward.1} parent=63 // pred_check
        %p1687 = pneg %p278
      $region66: #{discriminator_forward.1} parent=63 // pred_check_branch
        %1689 = sbr.rel (%p1687) target = $region68
      $region67: #{discriminator_forward.1} parent=63 // pred_region
        _
      $region68: #{discriminator_forward.1} parent=63 // pred_fallthru
        _
    $region64: #{discriminator_forward.1} parent=5 // pred_fallthru
      _
    %p1690 = scmp.le.s32.totalorder 2, %s19
    // Predicated region
    $region69: #{discriminator_forward.1} parent=5 // pred_check
      %p1691 = pneg %p1690
    $region70: #{discriminator_forward.1} parent=5 // pred_check_branch
      %1693 = sbr.rel (%p1691) target = $region72
    $region71: #{discriminator_forward.1} parent=5 // pred_region
      %s1694 = ssub.s32 %s19, 2
      // Predicated region
      $region73: #{discriminator_forward.1} parent=71 // pred_check
        %p1695 = pneg %p284
      $region74: #{discriminator_forward.1} parent=71 // pred_check_branch
        %1697 = sbr.rel (%p1695) target = $region76
      $region75: #{discriminator_forward.1} parent=71 // pred_region
        %p1698 = scmp.lt.s32.totalorder %s25, 2
        %s1699 = scalar_select %p1698, %s25, 2
        %s1700 = scalar_lea.vmem %s11, %s1699
      $region76: #{discriminator_forward.1} parent=71 // pred_fallthru
        _
    $region72: #{discriminator_forward.1} parent=5 // pred_fallthru
      _
  $region6: #{discriminator_forward.1} parent=0 // loop_footer
    %s23 = sadd.s32 1, %s19
  $region7: #{discriminator_forward.1} parent=0 // loop_footer_branch
    %18 = sbr.rel target = $region3
  $region8: #{discriminator_forward.1} parent=0 // loop_exit
    _

</llo_original>
